<compile_context>
chip_gen: v7x
topology: tpu7x:2x2x1
jax: 0.10.0
libtpu: 0.0.40
codegen_flags: <defaults>
</compile_context>

<pallas_src>
import math
import functools

import jax
import jax.numpy as jnp
from jax import lax
from jax.experimental import pallas as pl
from jax.experimental.pallas import tpu as pltpu


def _mha_kernel(*refs, n_heads, d_k, d_model, fuse_kv, emit_weights):
    """One (batch, q-tile) grid step.

    Grid = (B, num_q_tiles); the q-tile axis is 'arbitrary' so the K/V projection
    (computed once per batch element at qi == 0) persists in VMEM scratch and is
    reused by every q tile of that batch element.
    """
    idx = 0
    q_ref = refs[idx]; idx += 1
    k_ref = refs[idx]; idx += 1
    if fuse_kv:
        v_ref = k_ref                       # self-attention: key is value
    else:
        v_ref = refs[idx]; idx += 1
    wq_ref, bq_ref, wkv_ref, bkv_ref, wo_ref, bo_ref = refs[idx:idx + 6]; idx += 6
    out_ref = refs[idx]; idx += 1
    attn_ref = None
    if emit_weights:
        attn_ref = refs[idx]; idx += 1
    q_proj, kv_proj, ctx = refs[idx:idx + 3]

    qi = pl.program_id(1)
    cdt = q_proj.dtype                      # MXU operand dtype (bf16 stays bf16)
    sk = k_ref.shape[1]

    # ---- K/V projection: once per batch element, into persistent VMEM scratch.
    @pl.when(qi == 0)
    def _():
        if fuse_kv:
            kv_proj[...] = (jnp.dot(k_ref[0], wkv_ref[...],
                                    preferred_element_type=jnp.float32)
                            + bkv_ref[...]).astype(cdt)
        else:
            kv_proj[:, :d_model] = (
                jnp.dot(k_ref[0], wkv_ref[:, :d_model],
                        preferred_element_type=jnp.float32)
                + bkv_ref[:, :d_model]).astype(cdt)
            kv_proj[:, d_model:] = (
                jnp.dot(v_ref[0], wkv_ref[:, d_model:],
                        preferred_element_type=jnp.float32)
                + bkv_ref[:, d_model:]).astype(cdt)

    # ---- Q projection for this q tile (1/sqrt(d_k) already folded into wq/bq).
    q_proj[...] = (jnp.dot(q_ref[0], wq_ref[...],
                           preferred_element_type=jnp.float32)
                   + bq_ref[...]).astype(cdt)

    # Contract the last dims of Q_h/K_h -> no K transpose is materialized.
    contract_last = (((1,), (1,)), ((), ()))

    # ---- Per-head attention.  Static slices of scratch refs are free views and
    # nothing is carried across iterations as an SSA value, so live ranges stay
    # bounded even though the loop is a static Python loop over heads.
    for h in range(n_heads):
        lo, hi = h * d_k, (h + 1) * d_k
        qh = q_proj[:, lo:hi]                              # (tq, d_k)
        kh = kv_proj[:, lo:hi]                             # (Sk, d_k)
        vh = kv_proj[:, d_model + lo:d_model + hi]         # (Sk, d_k)

        s = lax.dot_general(qh, kh, contract_last,
                            preferred_element_type=jnp.float32)   # (tq, Sk)
        m = jnp.max(s, axis=-1, keepdims=True)
        e = jnp.exp(s - m)
        # Exact reciprocal: weights are a user-visible output (must match
        # torch.softmax); the context uses the same exact weights.
        inv = pl.reciprocal(jnp.sum(e, axis=-1, keepdims=True), approx=False)
        w = e * inv                                        # softmax weights, f32

        if emit_weights:
            # Heads stacked along the LANE axis -> lane-dense (tq, H*Sk) slab,
            # one contiguous output block per grid step.
            attn_ref[0, :, h * sk:(h + 1) * sk] = w.astype(attn_ref.dtype)

        ctx[:, lo:hi] = jnp.dot(w.astype(cdt), vh,
                                preferred_element_type=jnp.float32).astype(cdt)

    # ---- Single fused output projection: full-D contraction on the MXU instead
    # of H skinny K=d_k matmuls folded in per head.
    out = (jnp.dot(ctx[...], wo_ref[...], preferred_element_type=jnp.float32)
           + bo_ref[...])
    out_ref[0] = out.astype(out_ref.dtype)


def prepare_mha_params(params, n_heads: int, dtype=jnp.float32):
    """One-time conversion of PyTorch-convention Linear params ((out,in) weights,
    (out,) biases) into kernel layout: (in,out) weights, (1,out) bias rows, K/V
    weights concatenated to (D, 2D), and the 1/sqrt(d_k) scale folded into the
    query projection.  `dtype` should match the kernel compute dtype (bf16 for
    the fast MXU path)."""
    D = params["wq"].shape[0]
    d_k = D // n_heads
    scale = 1.0 / math.sqrt(d_k)
    prepped = dict(
        wq=(params["wq"] * scale).T,
        bq=(params["bq"] * scale).reshape(1, D),
        wkv=jnp.concatenate([params["wk"].T, params["wv"].T], axis=1),   # (D, 2D)
        bkv=jnp.concatenate([params["bk"], params["bv"]]).reshape(1, 2 * D),
        wo=params["wo"].T,
        bo=params["bo"].reshape(1, D),
    )
    return {k: v.astype(dtype) for k, v in prepped.items()}


def _choose_q_tile(sq: int) -> int:
    if sq <= 512:
        return sq
    # TODO(synk): pick 256-row tiles on v7x (64 MiB VMEM) and 128 on v5e via
    # pltpu.get_tpu_info(); 512 is a good v6e default.
    for t in (512, 256, 128, 64, 32, 16, 8):
        if sq % t == 0:
            return t
    return sq


def _vmem_limit_bytes() -> int:
    try:
        info = pltpu.get_tpu_info()
        cap = int(getattr(info, "vmem_capacity_bytes", 64 * 1024 * 1024))
    except Exception:
        cap = 64 * 1024 * 1024
    # Leave headroom for double-buffering / compiler scratch; cap at 100 MiB.
    return max(32 * 1024 * 1024, min(3 * cap // 4, 100 * 1024 * 1024))


def multi_head_attention(query, key, value, prep, *, n_heads: int,
                         return_weights: bool = True,
                         weights_dtype=jnp.float32,
                         compute_dtype=None,
                         q_tile=None):
    """query/key/value: (B, Sq/Sk, D).  prep: output of prepare_mha_params."""
    B, Sq, D = query.shape
    Sk = key.shape[1]
    d_k = D // n_heads
    cdt = jnp.dtype(compute_dtype) if compute_dtype is not None else query.dtype
    fuse_kv = key is value

    tq = q_tile or _choose_q_tile(Sq)
    assert Sq % tq == 0, "q_tile must divide seq_len_q"
    nq = Sq // tq

    # Cast prepared weights to the MXU operand dtype (no-op when already matching).
    wq, bq = prep["wq"].astype(cdt), prep["bq"].astype(cdt)
    wkv, bkv = prep["wkv"].astype(cdt), prep["bkv"].astype(cdt)
    wo, bo = prep["wo"].astype(cdt), prep["bo"].astype(cdt)

    kernel = functools.partial(_mha_kernel, n_heads=n_heads, d_k=d_k, d_model=D,
                               fuse_kv=fuse_kv, emit_weights=return_weights)

    q_spec = pl.BlockSpec((1, tq, D), lambda b, qi: (b, qi, 0))
    kv_spec = pl.BlockSpec((1, Sk, D), lambda b, qi: (b, 0, 0))
    # Grid-invariant weights: constant index_map -> DMA'd once, not per grid step.
    wq_spec = pl.BlockSpec((D, D), lambda b, qi: (0, 0))
    bq_spec = pl.BlockSpec((1, D), lambda b, qi: (0, 0))
    wkv_spec = pl.BlockSpec((D, 2 * D), lambda b, qi: (0, 0))
    bkv_spec = pl.BlockSpec((1, 2 * D), lambda b, qi: (0, 0))

    in_specs = [q_spec, kv_spec]
    args = [query, key]
    if not fuse_kv:
        in_specs.append(kv_spec)
        args.append(value)
    in_specs += [wq_spec, bq_spec, wkv_spec, bkv_spec, wq_spec, bq_spec]
    args += [wq, bq, wkv, bkv, wo, bo]

    out_specs = [pl.BlockSpec((1, tq, D), lambda b, qi: (b, qi, 0))]
    out_shapes = [jax.ShapeDtypeStruct((B, Sq, D), query.dtype)]
    if return_weights:
        out_specs.append(pl.BlockSpec((1, tq, n_heads * Sk),
                                      lambda b, qi: (b, qi, 0)))
        out_shapes.append(jax.ShapeDtypeStruct((B, Sq, n_heads * Sk),
                                               weights_dtype))

    scratch_shapes = [
        pltpu.VMEM((tq, D), cdt),        # projected Q tile
        pltpu.VMEM((Sk, 2 * D), cdt),    # projected K|V (persists across q tiles)
        pltpu.VMEM((tq, D), cdt),        # per-head context slab -> fused out proj
    ]

    # Advisory cost estimate with real element sizes.
    isz = jnp.dtype(query.dtype).itemsize
    wsz = jnp.dtype(cdt).itemsize
    attn_sz = jnp.dtype(weights_dtype).itemsize if return_weights else 0
    flops = int(2 * B * Sq * D * D                    # Q projection
                + 2 * B * Sk * (2 * D) * D            # fused K/V projection (per b)
                + 4 * B * n_heads * Sq * Sk * d_k     # scores + A@V
                + 2 * B * Sq * D * D)                 # output projection
    transcendentals = int(B * n_heads * Sq * Sk)      # exp
    bytes_accessed = int(
        isz * (B * Sq * D + (1 if fuse_kv else 2) * B * Sk * D)   # inputs
        + wsz * (4 * D * D + 4 * D)                               # weights
        + isz * B * Sq * D                                        # output
        + attn_sz * B * Sq * n_heads * Sk)                        # weights output

    result = pl.pallas_call(
        kernel,
        out_shape=tuple(out_shapes),
        grid_spec=pltpu.PrefetchScalarGridSpec(
            num_scalar_prefetch=0,
            grid=(B, nq),
            in_specs=in_specs,
            out_specs=out_specs,
            scratch_shapes=scratch_shapes),
        compiler_params=pltpu.CompilerParams(
            dimension_semantics=("parallel", "arbitrary"),
            vmem_limit_bytes=_vmem_limit_bytes()),
        cost_estimate=pl.CostEstimate(flops=flops,
                                      transcendentals=transcendentals,
                                      bytes_accessed=bytes_accessed),
    )(*args)

    if return_weights:
        out, attn_flat = result
        # Wrapper-side layout plumbing: lane-dense (B, Sq, H*Sk) -> (B, H, Sq, Sk).
        attn = attn_flat.reshape(B, Sq, n_heads, Sk).transpose(0, 2, 1, 3)
        return out, attn
    (out,) = result
    return out


def _init_linear(key, d_in, d_out):
    # Matches PyTorch nn.Linear default init: U(-1/sqrt(fan_in), 1/sqrt(fan_in)).
    kw, kb = jax.random.split(key)
    bound = 1.0 / math.sqrt(d_in)
    w = jax.random.uniform(kw, (d_out, d_in), jnp.float32, -bound, bound)
    b = jax.random.uniform(kb, (d_out,), jnp.float32, -bound, bound)
    return w, b


def _reference(query, key, value, params, n_heads):
    # Pure-JAX reference mirroring the PyTorch forward (eval, no mask).
    B, Sq, D = query.shape
    Sk = key.shape[1]
    d_k = D // n_heads
    Q = query @ params["wq"].T + params["bq"]
    K = key @ params["wk"].T + params["bk"]
    V = value @ params["wv"].T + params["bv"]
    Q = Q.reshape(B, Sq, n_heads, d_k).transpose(0, 2, 1, 3)
    K = K.reshape(B, Sk, n_heads, d_k).transpose(0, 2, 1, 3)
    V = V.reshape(B, Sk, n_heads, d_k).transpose(0, 2, 1, 3)
    scores = jnp.einsum("bhqd,bhkd->bhqk", Q, K) / math.sqrt(d_k)
    w = jax.nn.softmax(scores, axis=-1)
    out = jnp.einsum("bhqk,bhkd->bhqd", w, V)
    out = out.transpose(0, 2, 1, 3).reshape(B, Sq, D)
    out = out @ params["wo"].T + params["bo"]
    return out, w


if __name__ == "__main__":
    B, S, D, H = 2, 8, 32, 4
    root = jax.random.PRNGKey(0)
    kq, kk, kv, ko, kx = jax.random.split(root, 5)

    wq, bq = _init_linear(kq, D, D)
    wk, bk = _init_linear(kk, D, D)
    wv, bv = _init_linear(kv, D, D)
    wo, bo = _init_linear(ko, D, D)
    params = dict(wq=wq, bq=bq, wk=wk, bk=bk, wv=wv, bv=bv, wo=wo, bo=bo)

    x = jax.random.normal(kx, (B, S, D), jnp.float32)

    # One-time weight prep (transpose / scale-fold / K|V concat), hoisted out of
    # the per-call path.  Pass dtype=jnp.bfloat16 (and compute_dtype=jnp.bfloat16
    # below) for the bf16 MXU fast path on real workloads.
    prep = prepare_mha_params(params, H, dtype=jnp.float32)

    out, attn = multi_head_attention(x, x, x, prep, n_heads=H)
    out = jax.block_until_ready(out)
    attn = jax.block_until_ready(attn)

    ref_out, ref_attn = _reference(x, x, x, params, H)
    assert out.shape == (B, S, D)
    assert attn.shape == (B, H, S, S)
    assert jnp.allclose(out, ref_out, atol=5e-3, rtol=5e-3)
    assert jnp.allclose(attn, ref_attn, atol=5e-3, rtol=5e-3)

    print("KERNEL_OK")
</pallas_src>

<mosaic_0001>
module attributes {stable_mosaic.version = 11 : i64} {
  func.func @_mha_kernel(%arg0: i32, %arg1: i32, %arg2: memref<1x8x32xf32, #tpu.memory_space<vmem>>, %arg3: memref<1x8x32xf32, #tpu.memory_space<vmem>>, %arg4: memref<32x32xf32, #tpu.memory_space<vmem>>, %arg5: memref<1x32xf32, #tpu.memory_space<vmem>>, %arg6: memref<32x64xf32, #tpu.memory_space<vmem>>, %arg7: memref<1x64xf32, #tpu.memory_space<vmem>>, %arg8: memref<32x32xf32, #tpu.memory_space<vmem>>, %arg9: memref<1x32xf32, #tpu.memory_space<vmem>>, %arg10: memref<1x8x32xf32, #tpu.memory_space<vmem>>, %arg11: memref<1x8x32xf32, #tpu.memory_space<vmem>>, %arg12: memref<8x32xf32, #tpu.memory_space<vmem>>, %arg13: memref<8x64xf32, #tpu.memory_space<vmem>>, %arg14: memref<8x32xf32, #tpu.memory_space<vmem>>) attributes {dimension_semantics = [#tpu.dimension_semantics<parallel>, #tpu.dimension_semantics<arbitrary>], iteration_bounds = array<i64: 2, 1>, scalar_prefetch = 0 : i64, scratch_operands = 3 : i64, tpu.core_type = #tpu.core_type<tc>, window_params = [{transform_indices = @transform_0, window_bounds = array<i64: 1, 8, 32>}, {transform_indices = @transform_1, window_bounds = array<i64: 1, 8, 32>}, {pipeline_mode = #tpu.pipeline_mode<synchronous>, transform_indices = @transform_2, window_bounds = array<i64: 32, 32>}, {pipeline_mode = #tpu.pipeline_mode<synchronous>, transform_indices = @transform_3, window_bounds = array<i64: 1, 32>}, {pipeline_mode = #tpu.pipeline_mode<synchronous>, transform_indices = @transform_4, window_bounds = array<i64: 32, 64>}, {pipeline_mode = #tpu.pipeline_mode<synchronous>, transform_indices = @transform_5, window_bounds = array<i64: 1, 64>}, {pipeline_mode = #tpu.pipeline_mode<synchronous>, transform_indices = @transform_6, window_bounds = array<i64: 32, 32>}, {pipeline_mode = #tpu.pipeline_mode<synchronous>, transform_indices = @transform_7, window_bounds = array<i64: 1, 32>}, {transform_indices = @transform_8, window_bounds = array<i64: 1, 8, 32>}, {transform_indices = @transform_9, window_bounds = array<i64: 1, 8, 32>}]} {
    %c0_i32 = arith.constant 0 : i32
    %0 = arith.cmpi eq, %arg1, %c0_i32 : i32
    %1 = arith.extui %0 : i1 to i32
    %c0_i32_0 = arith.constant 0 : i32
    %2 = arith.cmpi ne, %1, %c0_i32_0 : i32
    scf.if %2 {
      %c0_72 = arith.constant 0 : index
      %c0_73 = arith.constant 0 : index
      %c0_74 = arith.constant 0 : index
      %96 = vector.load %arg3[%c0_72, %c0_73, %c0_74] : memref<1x8x32xf32, #tpu.memory_space<vmem>>, vector<1x8x32xf32>
      %97 = vector.shape_cast %96 : vector<1x8x32xf32> to vector<8x32xf32>
      %c0_75 = arith.constant 0 : index
      %c0_76 = arith.constant 0 : index
      %98 = vector.load %arg6[%c0_75, %c0_76] : memref<32x64xf32, #tpu.memory_space<vmem>>, vector<32x64xf32>
      %cst_77 = arith.constant dense<0.000000e+00> : vector<8x64xf32>
      %99 = tpu.matmul %97, %98, %cst_77 {dimension_numbers = #tpu.dot_dimension_numbers<[1], [0], [0], [1], [0, 0, 1, 1], [], []>} : vector<8x32xf32>, vector<32x64xf32>, vector<8x64xf32> -> vector<8x64xf32>
      %c0_78 = arith.constant 0 : index
      %c0_79 = arith.constant 0 : index
      %100 = vector.load %arg7[%c0_78, %c0_79] : memref<1x64xf32, #tpu.memory_space<vmem>>, vector<1x64xf32>
      %101 = vector.broadcast %100 : vector<1x64xf32> to vector<8x64xf32>
      %102 = arith.addf %99, %101 : vector<8x64xf32>
      %c0_80 = arith.constant 0 : index
      %c0_81 = arith.constant 0 : index
      %103 = vector.load %arg13[%c0_80, %c0_81] : memref<8x64xf32, #tpu.memory_space<vmem>>, vector<8x64xf32>
      tpu.vector_store %arg13[%c0_80, %c0_81], %102 {strides = array<i32>} : memref<8x64xf32, #tpu.memory_space<vmem>>, vector<8x64xf32>,
    } else {
    }
    %c0 = arith.constant 0 : index
    %c0_1 = arith.constant 0 : index
    %c0_2 = arith.constant 0 : index
    %3 = vector.load %arg2[%c0, %c0_1, %c0_2] : memref<1x8x32xf32, #tpu.memory_space<vmem>>, vector<1x8x32xf32>
    %4 = vector.shape_cast %3 : vector<1x8x32xf32> to vector<8x32xf32>
    %c0_3 = arith.constant 0 : index
    %c0_4 = arith.constant 0 : index
    %5 = vector.load %arg4[%c0_3, %c0_4] : memref<32x32xf32, #tpu.memory_space<vmem>>, vector<32x32xf32>
    %cst = arith.constant dense<0.000000e+00> : vector<8x32xf32>
    %6 = tpu.matmul %4, %5, %cst {dimension_numbers = #tpu.dot_dimension_numbers<[1], [0], [0], [1], [0, 0, 1, 1], [], []>} : vector<8x32xf32>, vector<32x32xf32>, vector<8x32xf32> -> vector<8x32xf32>
    %c0_5 = arith.constant 0 : index
    %c0_6 = arith.constant 0 : index
    %7 = vector.load %arg5[%c0_5, %c0_6] : memref<1x32xf32, #tpu.memory_space<vmem>>, vector<1x32xf32>
    %8 = vector.broadcast %7 : vector<1x32xf32> to vector<8x32xf32>
    %9 = arith.addf %6, %8 : vector<8x32xf32>
    %c0_7 = arith.constant 0 : index
    %c0_8 = arith.constant 0 : index
    %10 = vector.load %arg12[%c0_7, %c0_8] : memref<8x32xf32, #tpu.memory_space<vmem>>, vector<8x32xf32>
    tpu.vector_store %arg12[%c0_7, %c0_8], %9 {strides = array<i32>} : memref<8x32xf32, #tpu.memory_space<vmem>>, vector<8x32xf32>,
    %c0_9 = arith.constant 0 : index
    %c0_10 = arith.constant 0 : index
    %11 = vector.load %arg12[%c0_9, %c0_10] : memref<8x32xf32, #tpu.memory_space<vmem>>, vector<8x8xf32>
    %c0_11 = arith.constant 0 : index
    %c0_12 = arith.constant 0 : index
    %12 = vector.load %arg13[%c0_11, %c0_12] : memref<8x64xf32, #tpu.memory_space<vmem>>, vector<8x8xf32>
    %c0_13 = arith.constant 0 : index
    %c32 = arith.constant 32 : index
    %13 = vector.load %arg13[%c0_13, %c32] : memref<8x64xf32, #tpu.memory_space<vmem>>, vector<8x8xf32>
    %cst_14 = arith.constant dense<0.000000e+00> : vector<8x8xf32>
    %14 = tpu.matmul %11, %12, %cst_14 {dimension_numbers = #tpu.dot_dimension_numbers<[1], [1], [0], [0], [0, 0, 1, 0], [], []>} : vector<8x8xf32>, vector<8x8xf32>, vector<8x8xf32> -> vector<8x8xf32>
    %cst_15 = arith.constant dense<0xFF800000> : vector<8xf32>
    %15 = vector.multi_reduction <maximumf>, %14, %cst_15 [1] : vector<8x8xf32> to vector<8xf32>
    %16 = vector.shape_cast %15 : vector<8xf32> to vector<8x1xf32>
    %17 = vector.broadcast %16 : vector<8x1xf32> to vector<8x8xf32>
    %18 = arith.subf %14, %17 : vector<8x8xf32>
    %19 = math.exp %18 : vector<8x8xf32>
    %cst_16 = arith.constant dense<0.000000e+00> : vector<8xf32>
    %20 = vector.multi_reduction <add>, %19, %cst_16 [1] : vector<8x8xf32> to vector<8xf32>
    %21 = vector.shape_cast %20 : vector<8xf32> to vector<8x1xf32>
    %22 = tpu.reciprocal %21 : vector<8x1xf32> -> vector<8x1xf32>
    %23 = vector.broadcast %22 : vector<8x1xf32> to vector<8x8xf32>
    %24 = arith.mulf %19, %23 : vector<8x8xf32>
    %c0_17 = arith.constant 0 : index
    %c0_18 = arith.constant 0 : index
    %c0_19 = arith.constant 0 : index
    %25 = vector.load %arg11[%c0_17, %c0_18, %c0_19] : memref<1x8x32xf32, #tpu.memory_space<vmem>>, vector<1x8x8xf32>
    %26 = vector.shape_cast %25 : vector<1x8x8xf32> to vector<8x8xf32>
    %27 = vector.shape_cast %24 : vector<8x8xf32> to vector<1x8x8xf32>
    tpu.vector_store %arg11[%c0_17, %c0_18, %c0_19], %27 {strides = array<i32>} : memref<1x8x32xf32, #tpu.memory_space<vmem>>, vector<1x8x8xf32>,
    %cst_20 = arith.constant dense<0.000000e+00> : vector<8x8xf32>
    %28 = tpu.matmul %24, %13, %cst_20 {dimension_numbers = #tpu.dot_dimension_numbers<[1], [0], [0], [1], [0, 0, 1, 1], [], []>} : vector<8x8xf32>, vector<8x8xf32>, vector<8x8xf32> -> vector<8x8xf32>
    %c0_21 = arith.constant 0 : index
    %c0_22 = arith.constant 0 : index
    %29 = vector.load %arg14[%c0_21, %c0_22] : memref<8x32xf32, #tpu.memory_space<vmem>>, vector<8x8xf32>
    tpu.vector_store %arg14[%c0_21, %c0_22], %28 {strides = array<i32>} : memref<8x32xf32, #tpu.memory_space<vmem>>, vector<8x8xf32>,
    %c0_23 = arith.constant 0 : index
    %c8 = arith.constant 8 : index
    %30 = vector.load %arg12[%c0_23, %c8] : memref<8x32xf32, #tpu.memory_space<vmem>>, vector<8x8xf32>
    %c0_24 = arith.constant 0 : index
    %c8_25 = arith.constant 8 : index
    %31 = vector.load %arg13[%c0_24, %c8_25] : memref<8x64xf32, #tpu.memory_space<vmem>>, vector<8x8xf32>
    %c0_26 = arith.constant 0 : index
    %c40 = arith.constant 40 : index
    %32 = vector.load %arg13[%c0_26, %c40] : memref<8x64xf32, #tpu.memory_space<vmem>>, vector<8x8xf32>
    %cst_27 = arith.constant dense<0.000000e+00> : vector<8x8xf32>
    %33 = tpu.matmul %30, %31, %cst_27 {dimension_numbers = #tpu.dot_dimension_numbers<[1], [1], [0], [0], [0, 0, 1, 0], [], []>} : vector<8x8xf32>, vector<8x8xf32>, vector<8x8xf32> -> vector<8x8xf32>
    %cst_28 = arith.constant dense<0xFF800000> : vector<8xf32>
    %34 = vector.multi_reduction <maximumf>, %33, %cst_28 [1] : vector<8x8xf32> to vector<8xf32>
    %35 = vector.shape_cast %34 : vector<8xf32> to vector<8x1xf32>
    %36 = vector.broadcast %35 : vector<8x1xf32> to vector<8x8xf32>
    %37 = arith.subf %33, %36 : vector<8x8xf32>
    %38 = math.exp %37 : vector<8x8xf32>
    %cst_29 = arith.constant dense<0.000000e+00> : vector<8xf32>
    %39 = vector.multi_reduction <add>, %38, %cst_29 [1] : vector<8x8xf32> to vector<8xf32>
    %40 = vector.shape_cast %39 : vector<8xf32> to vector<8x1xf32>
    %41 = tpu.reciprocal %40 : vector<8x1xf32> -> vector<8x1xf32>
    %42 = vector.broadcast %41 : vector<8x1xf32> to vector<8x8xf32>
    %43 = arith.mulf %38, %42 : vector<8x8xf32>
    %c0_30 = arith.constant 0 : index
    %c0_31 = arith.constant 0 : index
    %c8_32 = arith.constant 8 : index
    %44 = vector.load %arg11[%c0_30, %c0_31, %c8_32] : memref<1x8x32xf32, #tpu.memory_space<vmem>>, vector<1x8x8xf32>
    %45 = vector.shape_cast %44 : vector<1x8x8xf32> to vector<8x8xf32>
    %46 = vector.shape_cast %43 : vector<8x8xf32> to vector<1x8x8xf32>
    tpu.vector_store %arg11[%c0_30, %c0_31, %c8_32], %46 {strides = array<i32>} : memref<1x8x32xf32, #tpu.memory_space<vmem>>, vector<1x8x8xf32>,
    %cst_33 = arith.constant dense<0.000000e+00> : vector<8x8xf32>
    %47 = tpu.matmul %43, %32, %cst_33 {dimension_numbers = #tpu.dot_dimension_numbers<[1], [0], [0], [1], [0, 0, 1, 1], [], []>} : vector<8x8xf32>, vector<8x8xf32>, vector<8x8xf32> -> vector<8x8xf32>
    %c0_34 = arith.constant 0 : index
    %c8_35 = arith.constant 8 : index
    %48 = vector.load %arg14[%c0_34, %c8_35] : memref<8x32xf32, #tpu.memory_space<vmem>>, vector<8x8xf32>
    tpu.vector_store %arg14[%c0_34, %c8_35], %47 {strides = array<i32>} : memref<8x32xf32, #tpu.memory_space<vmem>>, vector<8x8xf32>,
    %c0_36 = arith.constant 0 : index
    %c16 = arith.constant 16 : index
    %49 = vector.load %arg12[%c0_36, %c16] : memref<8x32xf32, #tpu.memory_space<vmem>>, vector<8x8xf32>
    %c0_37 = arith.constant 0 : index
    %c16_38 = arith.constant 16 : index
    %50 = vector.load %arg13[%c0_37, %c16_38] : memref<8x64xf32, #tpu.memory_space<vmem>>, vector<8x8xf32>
    %c0_39 = arith.constant 0 : index
    %c48 = arith.constant 48 : index
    %51 = vector.load %arg13[%c0_39, %c48] : memref<8x64xf32, #tpu.memory_space<vmem>>, vector<8x8xf32>
    %cst_40 = arith.constant dense<0.000000e+00> : vector<8x8xf32>
    %52 = tpu.matmul %49, %50, %cst_40 {dimension_numbers = #tpu.dot_dimension_numbers<[1], [1], [0], [0], [0, 0, 1, 0], [], []>} : vector<8x8xf32>, vector<8x8xf32>, vector<8x8xf32> -> vector<8x8xf32>
    %cst_41 = arith.constant dense<0xFF800000> : vector<8xf32>
    %53 = vector.multi_reduction <maximumf>, %52, %cst_41 [1] : vector<8x8xf32> to vector<8xf32>
    %54 = vector.shape_cast %53 : vector<8xf32> to vector<8x1xf32>
    %55 = vector.broadcast %54 : vector<8x1xf32> to vector<8x8xf32>
    %56 = arith.subf %52, %55 : vector<8x8xf32>
    %57 = math.exp %56 : vector<8x8xf32>
    %cst_42 = arith.constant dense<0.000000e+00> : vector<8xf32>
    %58 = vector.multi_reduction <add>, %57, %cst_42 [1] : vector<8x8xf32> to vector<8xf32>
    %59 = vector.shape_cast %58 : vector<8xf32> to vector<8x1xf32>
    %60 = tpu.reciprocal %59 : vector<8x1xf32> -> vector<8x1xf32>
    %61 = vector.broadcast %60 : vector<8x1xf32> to vector<8x8xf32>
    %62 = arith.mulf %57, %61 : vector<8x8xf32>
    %c0_43 = arith.constant 0 : index
    %c0_44 = arith.constant 0 : index
    %c16_45 = arith.constant 16 : index
    %63 = vector.load %arg11[%c0_43, %c0_44, %c16_45] : memref<1x8x32xf32, #tpu.memory_space<vmem>>, vector<1x8x8xf32>
    %64 = vector.shape_cast %63 : vector<1x8x8xf32> to vector<8x8xf32>
    %65 = vector.shape_cast %62 : vector<8x8xf32> to vector<1x8x8xf32>
    tpu.vector_store %arg11[%c0_43, %c0_44, %c16_45], %65 {strides = array<i32>} : memref<1x8x32xf32, #tpu.memory_space<vmem>>, vector<1x8x8xf32>,
    %cst_46 = arith.constant dense<0.000000e+00> : vector<8x8xf32>
    %66 = tpu.matmul %62, %51, %cst_46 {dimension_numbers = #tpu.dot_dimension_numbers<[1], [0], [0], [1], [0, 0, 1, 1], [], []>} : vector<8x8xf32>, vector<8x8xf32>, vector<8x8xf32> -> vector<8x8xf32>
    %c0_47 = arith.constant 0 : index
    %c16_48 = arith.constant 16 : index
    %67 = vector.load %arg14[%c0_47, %c16_48] : memref<8x32xf32, #tpu.memory_space<vmem>>, vector<8x8xf32>
    tpu.vector_store %arg14[%c0_47, %c16_48], %66 {strides = array<i32>} : memref<8x32xf32, #tpu.memory_space<vmem>>, vector<8x8xf32>,
    %c0_49 = arith.constant 0 : index
    %c24 = arith.constant 24 : index
    %68 = vector.load %arg12[%c0_49, %c24] : memref<8x32xf32, #tpu.memory_space<vmem>>, vector<8x8xf32>
    %c0_50 = arith.constant 0 : index
    %c24_51 = arith.constant 24 : index
    %69 = vector.load %arg13[%c0_50, %c24_51] : memref<8x64xf32, #tpu.memory_space<vmem>>, vector<8x8xf32>
    %c0_52 = arith.constant 0 : index
    %c56 = arith.constant 56 : index
    %70 = vector.load %arg13[%c0_52, %c56] : memref<8x64xf32, #tpu.memory_space<vmem>>, vector<8x8xf32>
    %cst_53 = arith.constant dense<0.000000e+00> : vector<8x8xf32>
    %71 = tpu.matmul %68, %69, %cst_53 {dimension_numbers = #tpu.dot_dimension_numbers<[1], [1], [0], [0], [0, 0, 1, 0], [], []>} : vector<8x8xf32>, vector<8x8xf32>, vector<8x8xf32> -> vector<8x8xf32>
    %cst_54 = arith.constant dense<0xFF800000> : vector<8xf32>
    %72 = vector.multi_reduction <maximumf>, %71, %cst_54 [1] : vector<8x8xf32> to vector<8xf32>
    %73 = vector.shape_cast %72 : vector<8xf32> to vector<8x1xf32>
    %74 = vector.broadcast %73 : vector<8x1xf32> to vector<8x8xf32>
    %75 = arith.subf %71, %74 : vector<8x8xf32>
    %76 = math.exp %75 : vector<8x8xf32>
    %cst_55 = arith.constant dense<0.000000e+00> : vector<8xf32>
    %77 = vector.multi_reduction <add>, %76, %cst_55 [1] : vector<8x8xf32> to vector<8xf32>
    %78 = vector.shape_cast %77 : vector<8xf32> to vector<8x1xf32>
    %79 = tpu.reciprocal %78 : vector<8x1xf32> -> vector<8x1xf32>
    %80 = vector.broadcast %79 : vector<8x1xf32> to vector<8x8xf32>
    %81 = arith.mulf %76, %80 : vector<8x8xf32>
    %c0_56 = arith.constant 0 : index
    %c0_57 = arith.constant 0 : index
    %c24_58 = arith.constant 24 : index
    %82 = vector.load %arg11[%c0_56, %c0_57, %c24_58] : memref<1x8x32xf32, #tpu.memory_space<vmem>>, vector<1x8x8xf32>
    %83 = vector.shape_cast %82 : vector<1x8x8xf32> to vector<8x8xf32>
    %84 = vector.shape_cast %81 : vector<8x8xf32> to vector<1x8x8xf32>
    tpu.vector_store %arg11[%c0_56, %c0_57, %c24_58], %84 {strides = array<i32>} : memref<1x8x32xf32, #tpu.memory_space<vmem>>, vector<1x8x8xf32>,
    %cst_59 = arith.constant dense<0.000000e+00> : vector<8x8xf32>
    %85 = tpu.matmul %81, %70, %cst_59 {dimension_numbers = #tpu.dot_dimension_numbers<[1], [0], [0], [1], [0, 0, 1, 1], [], []>} : vector<8x8xf32>, vector<8x8xf32>, vector<8x8xf32> -> vector<8x8xf32>
    %c0_60 = arith.constant 0 : index
    %c24_61 = arith.constant 24 : index
    %86 = vector.load %arg14[%c0_60, %c24_61] : memref<8x32xf32, #tpu.memory_space<vmem>>, vector<8x8xf32>
    tpu.vector_store %arg14[%c0_60, %c24_61], %85 {strides = array<i32>} : memref<8x32xf32, #tpu.memory_space<vmem>>, vector<8x8xf32>,
    %c0_62 = arith.constant 0 : index
    %c0_63 = arith.constant 0 : index
    %87 = vector.load %arg14[%c0_62, %c0_63] : memref<8x32xf32, #tpu.memory_space<vmem>>, vector<8x32xf32>
    %c0_64 = arith.constant 0 : index
    %c0_65 = arith.constant 0 : index
    %88 = vector.load %arg8[%c0_64, %c0_65] : memref<32x32xf32, #tpu.memory_space<vmem>>, vector<32x32xf32>
    %cst_66 = arith.constant dense<0.000000e+00> : vector<8x32xf32>
    %89 = tpu.matmul %87, %88, %cst_66 {dimension_numbers = #tpu.dot_dimension_numbers<[1], [0], [0], [1], [0, 0, 1, 1], [], []>} : vector<8x32xf32>, vector<32x32xf32>, vector<8x32xf32> -> vector<8x32xf32>
    %c0_67 = arith.constant 0 : index
    %c0_68 = arith.constant 0 : index
    %90 = vector.load %arg9[%c0_67, %c0_68] : memref<1x32xf32, #tpu.memory_space<vmem>>, vector<1x32xf32>
    %91 = vector.broadcast %90 : vector<1x32xf32> to vector<8x32xf32>
    %92 = arith.addf %89, %91 : vector<8x32xf32>
    %c0_69 = arith.constant 0 : index
    %c0_70 = arith.constant 0 : index
    %c0_71 = arith.constant 0 : index
    %93 = vector.load %arg10[%c0_69, %c0_70, %c0_71] : memref<1x8x32xf32, #tpu.memory_space<vmem>>, vector<1x8x32xf32>
    %94 = vector.shape_cast %93 : vector<1x8x32xf32> to vector<8x32xf32>
    %95 = vector.shape_cast %92 : vector<8x32xf32> to vector<1x8x32xf32>
    tpu.vector_store %arg10[%c0_69, %c0_70, %c0_71], %95 {strides = array<i32>} : memref<1x8x32xf32, #tpu.memory_space<vmem>>, vector<1x8x32xf32>,
    return
  }
  func.func @transform_0(%arg0: i32, %arg1: i32) -> (i32, i32, i32) {
    %c0_i32 = arith.constant 0 : i32
    %c0_i32_0 = arith.constant 0 : i32
    return %arg0, %arg1, %c0_i32 : i32, i32, i32
  }
  func.func @transform_1(%arg0: i32, %arg1: i32) -> (i32, i32, i32) {
    %c0_i32 = arith.constant 0 : i32
    %c0_i32_0 = arith.constant 0 : i32
    %c0_i32_1 = arith.constant 0 : i32
    return %arg0, %c0_i32, %c0_i32_0 : i32, i32, i32
  }
  func.func @transform_2(%arg0: i32, %arg1: i32) -> (i32, i32) {
    %c0_i32 = arith.constant 0 : i32
    %c0_i32_0 = arith.constant 0 : i32
    %c0_i32_1 = arith.constant 0 : i32
    return %c0_i32, %c0_i32_0 : i32, i32
  }
  func.func @transform_3(%arg0: i32, %arg1: i32) -> (i32, i32) {
    %c0_i32 = arith.constant 0 : i32
    %c0_i32_0 = arith.constant 0 : i32
    %c0_i32_1 = arith.constant 0 : i32
    return %c0_i32, %c0_i32_0 : i32, i32
  }
  func.func @transform_4(%arg0: i32, %arg1: i32) -> (i32, i32) {
    %c0_i32 = arith.constant 0 : i32
    %c0_i32_0 = arith.constant 0 : i32
    %c0_i32_1 = arith.constant 0 : i32
    return %c0_i32, %c0_i32_0 : i32, i32
  }
  func.func @transform_5(%arg0: i32, %arg1: i32) -> (i32, i32) {
    %c0_i32 = arith.constant 0 : i32
    %c0_i32_0 = arith.constant 0 : i32
    %c0_i32_1 = arith.constant 0 : i32
    return %c0_i32, %c0_i32_0 : i32, i32
  }
  func.func @transform_6(%arg0: i32, %arg1: i32) -> (i32, i32) {
    %c0_i32 = arith.constant 0 : i32
    %c0_i32_0 = arith.constant 0 : i32
    %c0_i32_1 = arith.constant 0 : i32
    return %c0_i32, %c0_i32_0 : i32, i32
  }
  func.func @transform_7(%arg0: i32, %arg1: i32) -> (i32, i32) {
    %c0_i32 = arith.constant 0 : i32
    %c0_i32_0 = arith.constant 0 : i32
    %c0_i32_1 = arith.constant 0 : i32
    return %c0_i32, %c0_i32_0 : i32, i32
  }
  func.func @transform_8(%arg0: i32, %arg1: i32) -> (i32, i32, i32) {
    %c0_i32 = arith.constant 0 : i32
    %c0_i32_0 = arith.constant 0 : i32
    return %arg0, %arg1, %c0_i32 : i32, i32, i32
  }
  func.func @transform_9(%arg0: i32, %arg1: i32) -> (i32, i32, i32) {
    %c0_i32 = arith.constant 0 : i32
    %c0_i32_0 = arith.constant 0 : i32
    return %arg0, %arg1, %c0_i32 : i32, i32, i32
  }
}

</mosaic_0001>

<llo_original>
// kernel: tpu_custom_call.1
$region0: #{tpu_custom_call.1}
  #allocation0 [shape = 'u32[]', space=smem, size = 0x4, offset = 0x4, fixed_abs, tag = 'smem constant byte address 0x4 - core index']
  #allocation1 [shape = 'u32[144,128]{1,0:T(1,128)}', space=vmem, size = 0x12000, scoped, tag = 'internal scratch']
  #allocation2 [shape = 'f32[8,32]{1,0:T(8,128)}', space=vmem, size = 0x1000, scoped, tag = 'scratch operand']
  #allocation3 [shape = 'f32[8,64]{1,0:T(8,128)}', space=vmem, size = 0x1000, scoped, tag = 'scratch operand']
  #allocation4 [shape = 'f32[8,32]{1,0:T(8,128)}', space=vmem, size = 0x1000, scoped, tag = 'scratch operand']
  %s0 = inlined_call_operand.hbm [shape: f32[2,8,32], index: 0, kind: input, shape index: {}]
  %s1 = inlined_call_operand.hbm [shape: f32[2,8,32], index: 1, kind: input, shape index: {}]
  %s2 = inlined_call_operand.hbm [shape: f32[32,32], index: 2, kind: input, shape index: {}]
  %s3 = inlined_call_operand.vmem [shape: f32[1,32], index: 3, kind: input, shape index: {}]
  %s4 = inlined_call_operand.hbm [shape: f32[32,64], index: 4, kind: input, shape index: {}]
  %s5 = inlined_call_operand.vmem [shape: f32[1,64], index: 5, kind: input, shape index: {}]
  %s6 = inlined_call_operand.hbm [shape: f32[32,32], index: 6, kind: input, shape index: {}]
  %s7 = inlined_call_operand.vmem [shape: f32[1,32], index: 7, kind: input, shape index: {}]
  %s8 = inlined_call_operand.hbm [shape: f32[2,8,32], index: 8, kind: output, shape index: {0}]
  %s9 = inlined_call_operand.hbm [shape: f32[2,8,32], index: 9, kind: output, shape index: {1}]
  %10 = xla_tuple %s8, %s9
  %s11 = sld [smem:[#allocation0]]
  $region97: #{tpu_custom_call.1} parent=0
    _
  %s13 = ssub.s32 1, %s11
  %s14 = scalar_select 0, %s13, %s11
  $region1: #{tpu_custom_call.1} parent=0
    #allocation5 [shape = 'u8[8192]{0}', space=vmem, size = 0x2000, scoped, tag = 'input window, operand 0']
    #allocation6 [shape = 's32[2]{0}', space=sflag, size = 0x8, scoped, tag = 'scoped memory for tpu_custom_call.1']
    #allocation7 [shape = 's32[2]{0}', space=sflag, size = 0x8, scoped, tag = 'scoped memory for tpu_custom_call.1']
    #allocation8 [shape = 'u8[8192]{0}', space=vmem, size = 0x2000, scoped, tag = 'input window, operand 1']
    #allocation9 [shape = 's32[2]{0}', space=sflag, size = 0x8, scoped, tag = 'scoped memory for tpu_custom_call.1']
    #allocation10 [shape = 'u8[16384]{0}', space=vmem, size = 0x4000, scoped, tag = 'input window, operand 2, single buffered']
    #allocation11 [shape = 'u8[16384]{0}', space=vmem, size = 0x4000, scoped, tag = 'input window, operand 4, single buffered']
    #allocation12 [shape = 's32[1]{0}', space=sflag, size = 0x4, scoped, tag = 'scoped memory for tpu_custom_call.1']
    #allocation13 [shape = 'u8[16384]{0}', space=vmem, size = 0x4000, scoped, tag = 'input window, operand 6, single buffered']
    #allocation14 [shape = 'u8[8192]{0}', space=vmem, size = 0x2000, scoped, tag = 'output window, operand 0']
    #allocation15 [shape = 'u8[8192]{0}', space=vmem, size = 0x2000, scoped, tag = 'output window, operand 1']
    #allocation16 [shape = 's32[2]{0}', space=sflag, size = 0x8, scoped, tag = 'scoped memory for tpu_custom_call.1']
    %15 = vsyncpa [#allocation6], 0
    %s16 = scalar_lea.sflag [#allocation6], 1
    %17 = vsyncpa %s16, 0
    %18 = vsyncpa [#allocation9], 0
    %s19 = scalar_lea.sflag [#allocation9], 1
    %20 = vsyncpa %s19, 0
    %21 = vsyncpa [#allocation12], 0
    %22 = vsyncpa [#allocation7], 0
    %s23 = scalar_lea.sflag [#allocation7], 1
    %24 = vsyncpa %s23, 0
    %25 = vsyncpa [#allocation16], 0
    %s26 = scalar_lea.sflag [#allocation16], 1
    %27 = vsyncpa %s26, 0
    loop: start=0, step=1, limit=4
    $region2: #{tpu_custom_call.1} parent=1 // loop_pre_header
      _
    $region3: #{tpu_custom_call.1} parent=1 // loop_header
      %s29 = sphi 0, %s33
      %p30 = scmp.ge.s32.totalorder %s29, 4
      %s36 = sphi 0, %s48
      %s37 = sphi 0, %s44
      %s38 = sphi 0, %s36
      %s39 = sphi 0, %s37
      %s40 = sphi 0, %s38
      %s41 = sphi 0, %s39
      %s53 = sphi 0, %s55
      %s56 = sphi 0, %s53
      %s57 = sphi 0, %s56
      %s73 = sphi 0, %s57
      %s79 = sphi 0, %s81
      %s82 = sphi 0, %s79
      %s83 = sphi 0, %s82
      %s99 = sphi 0, %s83
      %s103 = sphi 0, %s103
      %s105 = sphi 0, %s103
      %s106 = sphi 0, %s105
      %s120 = sphi 0, %s106
      %s124 = sphi 0, %s124
      %s126 = sphi 0, %s124
      %s127 = sphi 0, %s126
      %s141 = sphi 0, %s127
      %s145 = sphi 0, %s145
      %s147 = sphi 0, %s145
      %s148 = sphi 0, %s147
      %s162 = sphi 0, %s148
      %s166 = sphi 0, %s166
      %s168 = sphi 0, %s166
      %s169 = sphi 0, %s168
      %s183 = sphi 0, %s169
      %s187 = sphi 0, %s187
      %s189 = sphi 0, %s187
      %s190 = sphi 0, %s189
      %s204 = sphi 0, %s190
      %s208 = sphi 0, %s208
      %s210 = sphi 0, %s208
      %s211 = sphi 0, %s210
      %s225 = sphi 0, %s211
      %s233 = sphi 0, %s235
      %s236 = sphi 0, %s233
      %s237 = sphi 0, %s236
      %s253 = sphi 0, %s237
      %s261 = sphi 0, %s263
      %s264 = sphi 0, %s261
      %s265 = sphi 0, %s264
      %s281 = sphi 0, %s265
    $region4: #{tpu_custom_call.1} parent=1 // loop_header_branch
      %32 = sbr.rel (%p30) target = $region8
    $region5: #{tpu_custom_call.1} parent=1 // loop_body
      %s34 = ssub.s32 %s29, 1
      %s35 = ssub.s32 %s29, 2
      %s42 = sadd.s32 1, %s37
      %p43 = scmp.ge.s32.totalorder %s42, 1
      %s44 = scalar_select %p43, 0, %s42
      %s45 = sadd.s32 1, %s36
      %s46 = scalar_select %p43, %s45, %s36
      %p47 = scmp.ge.s32.totalorder %s46, 2
      %s48 = scalar_select %p47, 0, %s46
      %s49 = ssub.s32 %s36, %s48
      %s50 = ssub.s32 %s37, %s44
      %s51 = sor.u32 %s49, %s50
      %p52 = scmp.eq.s32.totalorder %s51, 0
      %s54 = sadd.s32 %s53, 1
      %s55 = scalar_select %p52, %s53, %s54
      %p58 = pneg %p52
      %p59 = scmp.eq.s32.totalorder %s29, 1
      %p60 = por %p58, %p59
      %p61 = scmp.ne.s32.totalorder %s53, %s56
      %p62 = scmp.eq.s32.totalorder %s29, 0
      %p63 = por %p61, %p62
      %p64 = scmp.ne.s32.totalorder %s53, %s56
      %p65 = scmp.eq.s32.totalorder %s34, 1
      %p66 = por %p64, %p65
      %p67 = scmp.ne.s32.totalorder %s56, %s57
      %p68 = scmp.eq.s32.totalorder %s34, 0
      %p69 = por %p67, %p68
      %p70 = scmp.ne.s32.totalorder %s56, %s57
      %p71 = scmp.eq.s32.totalorder %s35, 1
      %p72 = por %p70, %p71
      %p74 = scmp.ne.s32.totalorder %s57, %s73
      %p75 = scmp.eq.s32.totalorder %s35, 0
      %p76 = por %p74, %p75
      %s77 = ssub.s32 %s36, %s48
      %p78 = scmp.eq.s32.totalorder %s77, 0
      %s80 = sadd.s32 %s79, 1
      %s81 = scalar_select %p78, %s79, %s80
      %p84 = pneg %p78
      %p85 = scmp.eq.s32.totalorder %s29, 1
      %p86 = por %p84, %p85
      %p87 = scmp.ne.s32.totalorder %s79, %s82
      %p88 = scmp.eq.s32.totalorder %s29, 0
      %p89 = por %p87, %p88
      %p90 = scmp.ne.s32.totalorder %s79, %s82
      %p91 = scmp.eq.s32.totalorder %s34, 1
      %p92 = por %p90, %p91
      %p93 = scmp.ne.s32.totalorder %s82, %s83
      %p94 = scmp.eq.s32.totalorder %s34, 0
      %p95 = por %p93, %p94
      %p96 = scmp.ne.s32.totalorder %s82, %s83
      %p97 = scmp.eq.s32.totalorder %s35, 1
      %p98 = por %p96, %p97
      %p100 = scmp.ne.s32.totalorder %s83, %s99
      %p101 = scmp.eq.s32.totalorder %s35, 0
      %p102 = por %p100, %p101
      %s104 = sadd.s32 %s103, 1
      %p107 = scmp.eq.s32.totalorder %s29, 1
      %p108 = scmp.ne.s32.totalorder %s103, %s105
      %p109 = scmp.eq.s32.totalorder %s29, 0
      %p110 = por %p108, %p109
      %p111 = scmp.ne.s32.totalorder %s103, %s105
      %p112 = scmp.eq.s32.totalorder %s34, 1
      %p113 = por %p111, %p112
      %p114 = scmp.ne.s32.totalorder %s105, %s106
      %p115 = scmp.eq.s32.totalorder %s34, 0
      %p116 = por %p114, %p115
      %p117 = scmp.ne.s32.totalorder %s105, %s106
      %p118 = scmp.eq.s32.totalorder %s35, 1
      %p119 = por %p117, %p118
      %p121 = scmp.ne.s32.totalorder %s106, %s120
      %p122 = scmp.eq.s32.totalorder %s35, 0
      %p123 = por %p121, %p122
      %s125 = sadd.s32 %s124, 1
      %p128 = scmp.eq.s32.totalorder %s29, 1
      %p129 = scmp.ne.s32.totalorder %s124, %s126
      %p130 = scmp.eq.s32.totalorder %s29, 0
      %p131 = por %p129, %p130
      %p132 = scmp.ne.s32.totalorder %s124, %s126
      %p133 = scmp.eq.s32.totalorder %s34, 1
      %p134 = por %p132, %p133
      %p135 = scmp.ne.s32.totalorder %s126, %s127
      %p136 = scmp.eq.s32.totalorder %s34, 0
      %p137 = por %p135, %p136
      %p138 = scmp.ne.s32.totalorder %s126, %s127
      %p139 = scmp.eq.s32.totalorder %s35, 1
      %p140 = por %p138, %p139
      %p142 = scmp.ne.s32.totalorder %s127, %s141
      %p143 = scmp.eq.s32.totalorder %s35, 0
      %p144 = por %p142, %p143
      %s146 = sadd.s32 %s145, 1
      %p149 = scmp.eq.s32.totalorder %s29, 1
      %p150 = scmp.ne.s32.totalorder %s145, %s147
      %p151 = scmp.eq.s32.totalorder %s29, 0
      %p152 = por %p150, %p151
      %p153 = scmp.ne.s32.totalorder %s145, %s147
      %p154 = scmp.eq.s32.totalorder %s34, 1
      %p155 = por %p153, %p154
      %p156 = scmp.ne.s32.totalorder %s147, %s148
      %p157 = scmp.eq.s32.totalorder %s34, 0
      %p158 = por %p156, %p157
      %p159 = scmp.ne.s32.totalorder %s147, %s148
      %p160 = scmp.eq.s32.totalorder %s35, 1
      %p161 = por %p159, %p160
      %p163 = scmp.ne.s32.totalorder %s148, %s162
      %p164 = scmp.eq.s32.totalorder %s35, 0
      %p165 = por %p163, %p164
      %s167 = sadd.s32 %s166, 1
      %p170 = scmp.eq.s32.totalorder %s29, 1
      %p171 = scmp.ne.s32.totalorder %s166, %s168
      %p172 = scmp.eq.s32.totalorder %s29, 0
      %p173 = por %p171, %p172
      %p174 = scmp.ne.s32.totalorder %s166, %s168
      %p175 = scmp.eq.s32.totalorder %s34, 1
      %p176 = por %p174, %p175
      %p177 = scmp.ne.s32.totalorder %s168, %s169
      %p178 = scmp.eq.s32.totalorder %s34, 0
      %p179 = por %p177, %p178
      %p180 = scmp.ne.s32.totalorder %s168, %s169
      %p181 = scmp.eq.s32.totalorder %s35, 1
      %p182 = por %p180, %p181
      %p184 = scmp.ne.s32.totalorder %s169, %s183
      %p185 = scmp.eq.s32.totalorder %s35, 0
      %p186 = por %p184, %p185
      %s188 = sadd.s32 %s187, 1
      %p191 = scmp.eq.s32.totalorder %s29, 1
      %p192 = scmp.ne.s32.totalorder %s187, %s189
      %p193 = scmp.eq.s32.totalorder %s29, 0
      %p194 = por %p192, %p193
      %p195 = scmp.ne.s32.totalorder %s187, %s189
      %p196 = scmp.eq.s32.totalorder %s34, 1
      %p197 = por %p195, %p196
      %p198 = scmp.ne.s32.totalorder %s189, %s190
      %p199 = scmp.eq.s32.totalorder %s34, 0
      %p200 = por %p198, %p199
      %p201 = scmp.ne.s32.totalorder %s189, %s190
      %p202 = scmp.eq.s32.totalorder %s35, 1
      %p203 = por %p201, %p202
      %p205 = scmp.ne.s32.totalorder %s190, %s204
      %p206 = scmp.eq.s32.totalorder %s35, 0
      %p207 = por %p205, %p206
      %s209 = sadd.s32 %s208, 1
      %p212 = scmp.eq.s32.totalorder %s29, 1
      %p213 = scmp.ne.s32.totalorder %s208, %s210
      %p214 = scmp.eq.s32.totalorder %s29, 0
      %p215 = por %p213, %p214
      %p216 = scmp.ne.s32.totalorder %s208, %s210
      %p217 = scmp.eq.s32.totalorder %s34, 1
      %p218 = por %p216, %p217
      %p219 = scmp.ne.s32.totalorder %s210, %s211
      %p220 = scmp.eq.s32.totalorder %s34, 0
      %p221 = por %p219, %p220
      %p222 = scmp.ne.s32.totalorder %s210, %s211
      %p223 = scmp.eq.s32.totalorder %s35, 1
      %p224 = por %p222, %p223
      %p226 = scmp.ne.s32.totalorder %s211, %s225
      %p227 = scmp.eq.s32.totalorder %s35, 0
      %p228 = por %p226, %p227
      %s229 = ssub.s32 %s36, %s48
      %s230 = ssub.s32 %s37, %s44
      %s231 = sor.u32 %s229, %s230
      %p232 = scmp.eq.s32.totalorder %s231, 0
      %s234 = sadd.s32 %s233, 1
      %s235 = scalar_select %p232, %s233, %s234
      %p238 = pneg %p232
      %p239 = scmp.eq.s32.totalorder %s29, 1
      %p240 = por %p238, %p239
      %p241 = scmp.ne.s32.totalorder %s233, %s236
      %p242 = scmp.eq.s32.totalorder %s29, 0
      %p243 = por %p241, %p242
      %p244 = scmp.ne.s32.totalorder %s233, %s236
      %p245 = scmp.eq.s32.totalorder %s34, 1
      %p246 = por %p244, %p245
      %p247 = scmp.ne.s32.totalorder %s236, %s237
      %p248 = scmp.eq.s32.totalorder %s34, 0
      %p249 = por %p247, %p248
      %p250 = scmp.ne.s32.totalorder %s236, %s237
      %p251 = scmp.eq.s32.totalorder %s35, 1
      %p252 = por %p250, %p251
      %p254 = scmp.ne.s32.totalorder %s237, %s253
      %p255 = scmp.eq.s32.totalorder %s35, 0
      %p256 = por %p254, %p255
      %s257 = ssub.s32 %s36, %s48
      %s258 = ssub.s32 %s37, %s44
      %s259 = sor.u32 %s257, %s258
      %p260 = scmp.eq.s32.totalorder %s259, 0
      %s262 = sadd.s32 %s261, 1
      %s263 = scalar_select %p260, %s261, %s262
      %p266 = pneg %p260
      %p267 = scmp.eq.s32.totalorder %s29, 1
      %p268 = por %p266, %p267
      %p269 = scmp.ne.s32.totalorder %s261, %s264
      %p270 = scmp.eq.s32.totalorder %s29, 0
      %p271 = por %p269, %p270
      %p272 = scmp.ne.s32.totalorder %s261, %s264
      %p273 = scmp.eq.s32.totalorder %s34, 1
      %p274 = por %p272, %p273
      %p275 = scmp.ne.s32.totalorder %s264, %s265
      %p276 = scmp.eq.s32.totalorder %s34, 0
      %p277 = por %p275, %p276
      %p278 = scmp.ne.s32.totalorder %s264, %s265
      %p279 = scmp.eq.s32.totalorder %s35, 1
      %p280 = por %p278, %p279
      %p282 = scmp.ne.s32.totalorder %s265, %s281
      %p283 = scmp.eq.s32.totalorder %s35, 0
      %p284 = por %p282, %p283
      %p285 = scmp.le.s32.totalorder 1, %s29
      %p286 = scmp.lt.s32.totalorder %s29, 3
      %p287 = pnand %p285, %p286
      %p288 = pneg %p287
      // Predicated region
      $region9: #{tpu_custom_call.1} parent=5 // pred_check
        _
      $region10: #{tpu_custom_call.1} parent=5 // pred_check_branch
        %290 = sbr.rel (%p287) target = $region12
      $region11: #{tpu_custom_call.1} parent=5 // pred_region
        %s291 = ssub.s32 %s29, 1
        // Predicated region
        $region13: #{tpu_custom_call.1} parent=11 // pred_check
          %p292 = pneg %p116
        $region14: #{tpu_custom_call.1} parent=11 // pred_check_branch
          %294 = sbr.rel (%p292) target = $region16
        $region15: #{tpu_custom_call.1} parent=11 // pred_region
          %s296 = ssub.s32 512, 512
          %297 = vsyncadd [#allocation9], %s296
          %s298 = sshll.u32 [#allocation10], 4
          %s299 = int_to_ptr.vmem [resolvable:$true] %s298
          %304 = dma.hbm_to_vmem [thread:$0]  %s2, 512, %s299, [#allocation9], 128, 128, 8
        $region16: #{tpu_custom_call.1} parent=11 // pred_fallthru
          _
        // Predicated region
        $region17: #{tpu_custom_call.1} parent=11 // pred_check
          %p305 = pneg %p137
        $region18: #{tpu_custom_call.1} parent=11 // pred_check_branch
          %307 = sbr.rel (%p305) target = $region20
        $region19: #{tpu_custom_call.1} parent=11 // pred_region
          _
        $region20: #{tpu_custom_call.1} parent=11 // pred_fallthru
          _
        // Predicated region
        $region21: #{tpu_custom_call.1} parent=11 // pred_check
          %p308 = pneg %p158
        $region22: #{tpu_custom_call.1} parent=11 // pred_check_branch
          %310 = sbr.rel (%p308) target = $region24
        $region23: #{tpu_custom_call.1} parent=11 // pred_region
          %s312 = ssub.s32 512, 512
          %313 = vsyncadd [#allocation12], %s312
          %s314 = sshll.u32 [#allocation11], 4
          %s315 = int_to_ptr.vmem [resolvable:$true] %s314
          %320 = dma.hbm_to_vmem [thread:$0]  %s4, 512, %s315, [#allocation12], 128, 128, 8
        $region24: #{tpu_custom_call.1} parent=11 // pred_fallthru
          _
        // Predicated region
        $region25: #{tpu_custom_call.1} parent=11 // pred_check
          %p321 = pneg %p179
        $region26: #{tpu_custom_call.1} parent=11 // pred_check_branch
          %323 = sbr.rel (%p321) target = $region28
        $region27: #{tpu_custom_call.1} parent=11 // pred_region
          _
        $region28: #{tpu_custom_call.1} parent=11 // pred_fallthru
          _
        // Predicated region
        $region29: #{tpu_custom_call.1} parent=11 // pred_check
          %p324 = pneg %p200
        $region30: #{tpu_custom_call.1} parent=11 // pred_check_branch
          %326 = sbr.rel (%p324) target = $region32
        $region31: #{tpu_custom_call.1} parent=11 // pred_region
          %s328 = ssub.s32 512, 512
          %329 = vsyncadd [#allocation12], %s328
          %s330 = sshll.u32 [#allocation13], 4
          %s331 = int_to_ptr.vmem [resolvable:$true] %s330
          %336 = dma.hbm_to_vmem [thread:$0]  %s6, 512, %s331, [#allocation12], 128, 128, 8
        $region32: #{tpu_custom_call.1} parent=11 // pred_fallthru
          _
        // Predicated region
        $region33: #{tpu_custom_call.1} parent=11 // pred_check
          %p337 = pneg %p221
        $region34: #{tpu_custom_call.1} parent=11 // pred_check_branch
          %339 = sbr.rel (%p337) target = $region36
        $region35: #{tpu_custom_call.1} parent=11 // pred_region
          _
        $region36: #{tpu_custom_call.1} parent=11 // pred_fallthru
          _
      $region12: #{tpu_custom_call.1} parent=5 // pred_fallthru
        _
      %p340 = scmp.lt.s32.totalorder %s29, 2
      // Predicated region
      $region37: #{tpu_custom_call.1} parent=5 // pred_check
        %p341 = pneg %p340
      $region38: #{tpu_custom_call.1} parent=5 // pred_check_branch
        %343 = sbr.rel (%p341) target = $region40
      $region39: #{tpu_custom_call.1} parent=5 // pred_region
        // Predicated region
        $region41: #{tpu_custom_call.1} parent=39 // pred_check
          %p344 = pneg %p63
        $region42: #{tpu_custom_call.1} parent=39 // pred_check_branch
          %346 = sbr.rel (%p344) target = $region44
        $region43: #{tpu_custom_call.1} parent=39 // pred_region
          %s347 = sand.u32 %s53, 1
          %s348 = scalar_lea.sflag [#allocation6], %s347
          %s349 = sand.u32 %s53, 1
          %s350 = smul.addr %s349, 8
          %s351 = scalar_lea.vmem [#allocation5], %s350
          %s353 = ssub.s32 128, 128
          %354 = vsyncadd %s348, %s353
          %s355 = sadd.s32 %s37, %s36
          %s356 = smul.addr %s355, 128
          %s357 = scalar_lea.hbm %s0, %s356
          %s359 = sshll.u32 %s351, 4
          %s360 = int_to_ptr.vmem [resolvable:$true] %s359
          %362 = dma.hbm_to_vmem [thread:$0]  %s357, 128, %s360, %s348
        $region44: #{tpu_custom_call.1} parent=39 // pred_fallthru
          _
        // Predicated region
        $region45: #{tpu_custom_call.1} parent=39 // pred_check
          %p363 = pneg %p89
        $region46: #{tpu_custom_call.1} parent=39 // pred_check_branch
          %365 = sbr.rel (%p363) target = $region48
        $region47: #{tpu_custom_call.1} parent=39 // pred_region
          %s366 = sand.u32 %s29, 1
          %s367 = scalar_lea.sflag [#allocation9], %s366
          %s368 = sand.u32 %s79, 1
          %s369 = smul.addr %s368, 8
          %s370 = scalar_lea.vmem [#allocation8], %s369
          %s372 = ssub.s32 128, 128
          %373 = vsyncadd %s367, %s372
          %s374 = smul.addr %s36, 128
          %s375 = scalar_lea.hbm %s1, %s374
          %s377 = sshll.u32 %s370, 4
          %s378 = int_to_ptr.vmem [resolvable:$true] %s377
          %380 = dma.hbm_to_vmem [thread:$0]  %s375, 128, %s378, %s367
        $region48: #{tpu_custom_call.1} parent=39 // pred_fallthru
          _
      $region40: #{tpu_custom_call.1} parent=5 // pred_fallthru
        _
      %p381 = scmp.le.s32.totalorder 1, %s29
      %p382 = scmp.lt.s32.totalorder %s29, 3
      %p383 = pnand %p381, %p382
      %p384 = pneg %p383
      // Predicated region
      $region49: #{tpu_custom_call.1} parent=5 // pred_check
        _
      $region50: #{tpu_custom_call.1} parent=5 // pred_check_branch
        %386 = sbr.rel (%p383) target = $region52
      $region51: #{tpu_custom_call.1} parent=5 // pred_region
        %s387 = ssub.s32 %s29, 1
        %s388 = sand.u32 %s56, 1
        %s389 = scalar_lea.sflag [#allocation6], %s388
        %s390 = sand.u32 %s56, 1
        %s391 = smul.addr %s390, 8
        %s392 = scalar_lea.vmem [#allocation5], %s391
        // Predicated region
        $region53: #{tpu_custom_call.1} parent=51 // pred_check
          %p393 = pneg %p69
        $region54: #{tpu_custom_call.1} parent=51 // pred_check_branch
          %395 = sbr.rel (%p393) target = $region56
        $region55: #{tpu_custom_call.1} parent=51 // pred_region
          %396 = dma.done %s389, 128
        $region56: #{tpu_custom_call.1} parent=51 // pred_fallthru
          _
        %s397 = sand.u32 %s34, 1
        %s398 = scalar_lea.sflag [#allocation9], %s397
        %s399 = sand.u32 %s82, 1
        %s400 = smul.addr %s399, 8
        %s401 = scalar_lea.vmem [#allocation8], %s400
        // Predicated region
        $region57: #{tpu_custom_call.1} parent=51 // pred_check
          %p402 = pneg %p95
        $region58: #{tpu_custom_call.1} parent=51 // pred_check_branch
          %404 = sbr.rel (%p402) target = $region60
        $region59: #{tpu_custom_call.1} parent=51 // pred_region
          %405 = dma.done %s398, 128
        $region60: #{tpu_custom_call.1} parent=51 // pred_fallthru
          _
        // Predicated region
        $region61: #{tpu_custom_call.1} parent=51 // pred_check
          %p406 = pneg %p116
        $region62: #{tpu_custom_call.1} parent=51 // pred_check_branch
          %408 = sbr.rel (%p406) target = $region64
        $region63: #{tpu_custom_call.1} parent=51 // pred_region
          %409 = dma.done [#allocation9], 512
        $region64: #{tpu_custom_call.1} parent=51 // pred_fallthru
          _
        // Predicated region
        $region65: #{tpu_custom_call.1} parent=51 // pred_check
          %p410 = pneg %p158
        $region66: #{tpu_custom_call.1} parent=51 // pred_check_branch
          %412 = sbr.rel (%p410) target = $region68
        $region67: #{tpu_custom_call.1} parent=51 // pred_region
          %413 = dma.done [#allocation12], 512
        $region68: #{tpu_custom_call.1} parent=51 // pred_fallthru
          _
        // Predicated region
        $region69: #{tpu_custom_call.1} parent=51 // pred_check
          %p414 = pneg %p200
        $region70: #{tpu_custom_call.1} parent=51 // pred_check_branch
          %416 = sbr.rel (%p414) target = $region72
        $region71: #{tpu_custom_call.1} parent=51 // pred_region
          %417 = dma.done [#allocation12], 512
        $region72: #{tpu_custom_call.1} parent=51 // pred_fallthru
          _
        %s418 = sand.u32 %s56, 1
        %s419 = scalar_lea.sflag [#allocation6], %s418
        %s420 = sand.u32 %s56, 1
        %s421 = smul.addr %s420, 8
        %s422 = scalar_lea.vmem [#allocation5], %s421
        %p423 = pneg %p69
        %p424 = pneg %p66
        %s425 = sand.u32 %s34, 1
        %s426 = scalar_lea.sflag [#allocation9], %s425
        %s427 = sand.u32 %s82, 1
        %s428 = smul.addr %s427, 8
        %s429 = scalar_lea.vmem [#allocation8], %s428
        %p430 = pneg %p95
        %p431 = pneg %p92
        %p432 = pneg %p116
        %p433 = pneg %p113
        %p434 = pneg %p137
        %p435 = pneg %p134
        %p436 = pneg %p158
        %p437 = pneg %p155
        %p438 = pneg %p179
        %p439 = pneg %p176
        %p440 = pneg %p200
        %p441 = pneg %p197
        %p442 = pneg %p221
        %p443 = pneg %p218
        %p444 = pneg %p249
        %p445 = pneg %p246
        %s446 = sand.u32 %s236, 1
        %s447 = scalar_lea.sflag [#allocation7], %s446
        %s448 = sand.u32 %s236, 1
        %s449 = smul.addr %s448, 8
        %s450 = scalar_lea.vmem [#allocation14], %s449
        %p451 = pneg %p277
        %p452 = pneg %p274
        %s453 = sand.u32 %s264, 1
        %s454 = scalar_lea.sflag [#allocation16], %s453
        %s455 = sand.u32 %s264, 1
        %s456 = smul.addr %s455, 8
        %s457 = scalar_lea.vmem [#allocation15], %s456
        %p458 = scmp.eq.s32.totalorder %s39, 0
        // Predicated region
        $region73: #{tpu_custom_call.1} parent=51 // pred_check
          %p459 = pneg %p458
        $region74: #{tpu_custom_call.1} parent=51 // pred_check_branch
          %461 = sbr.rel (%p459) target = $region76
        $region75: #{tpu_custom_call.1} parent=51 // pred_region
          %v462 = vld [vmem:[%s401] sm:$0xff]
          %v463 = vld [vmem:[#allocation11] sm:$0xff]
          %v464 = vld [vmem:[#allocation11 + $0x8] sm:$0xff]
          %v465 = vld [vmem:[#allocation11 + $0x10] sm:$0xff]
          %v466 = vld [vmem:[#allocation11 + $0x18] sm:$0xff]
          %v467 = vld [vmem:[%s5] sm:$0x1]
          %v469 = vlaneseq
          %v470 = vshrl.u32 %v469, 7
          %v471 = vsub.s32 0, %v470
          %v472 = vrot.slane %v467, %v471
          %vm474 = vcmask 261120
          %v476 = vsel %vm474, %v462, 0
          %478 = vmatprep.subr.mxu0 0.0
          %479 = vmatpush1.msra.mxu0 %v463
          %480 = vmatprep.subr.mxu0 0.0
          %481 = vmatpush1.msra.mxu0 %v464
          %482 = vmatprep.subr.mxu0 0.0
          %483 = vmatpush1.msra.mxu0 %v465
          %484 = vmatprep.subr.mxu0 0.0
          %485 = vmatpush1.msra.mxu0 %v466
          %486 = vmatprep.subr.mxu0 0.0
          %487 = vmatpush1.msra.mxu0 0.0
          %488 = vmatprep.subr.mxu0 0.0
          %489 = vmatpush1.msra.mxu0 0.0
          %490 = vmatprep.subr.mxu0 0.0
          %491 = vmatpush1.msra.mxu0 0.0
          %492 = vmatprep.subr.mxu0 0.0
          %493 = vmatpush1.msra.mxu0 0.0
          %494 = vmatprep.subr.mxu0 0.0
          %495 = vmatpush1.msra.mxu0 0.0
          %496 = vmatprep.subr.mxu0 0.0
          %497 = vmatpush1.msra.mxu0 0.0
          %498 = vmatprep.subr.mxu0 0.0
          %499 = vmatpush1.msra.mxu0 0.0
          %500 = vmatprep.subr.mxu0 0.0
          %501 = vmatpush1.msra.mxu0 0.0
          %502 = vmatprep.subr.mxu0 0.0
          %503 = vmatpush1.msra.mxu0 0.0
          %504 = vmatprep.subr.mxu0 0.0
          %505 = vmatpush1.msra.mxu0 0.0
          %506 = vmatprep.subr.mxu0 0.0
          %507 = vmatpush1.msra.mxu0 0.0
          %508 = vmatprep.subr.mxu0 0.0
          %509 = vmatpush1.msra.mxu0 0.0
          %510 = vmatprep.subr.mxu0 0.0
          %511 = vmatpush1.msra.mxu0 0.0
          %512 = vmatprep.subr.mxu0 0.0
          %513 = vmatpush1.msra.mxu0 0.0
          %514 = vmatprep.subr.mxu0 0.0
          %515 = vmatpush1.msra.mxu0 0.0
          %516 = vmatprep.subr.mxu0 0.0
          %517 = vmatpush1.msra.mxu0 0.0
          %518 = vmatprep.subr.mxu0 0.0
          %519 = vmatpush1.msra.mxu0 0.0
          %520 = vmatprep.subr.mxu0 0.0
          %521 = vmatpush1.msra.mxu0 0.0
          %522 = vmatprep.subr.mxu0 0.0
          %523 = vmatpush1.msra.mxu0 0.0
          %524 = vmatprep.subr.mxu0 0.0
          %525 = vmatpush1.msra.mxu0 0.0
          %526 = vmatprep.subr.mxu0 0.0
          %527 = vmatpush1.msra.mxu0 0.0
          %528 = vmatprep.subr.mxu0 0.0
          %529 = vmatpush1.msra.mxu0 0.0
          %530 = vmatprep.subr.mxu0 0.0
          %531 = vmatpush1.msra.mxu0 0.0
          %532 = vmatprep.subr.mxu0 0.0
          %533 = vmatpush1.msra.mxu0 0.0
          %534 = vmatprep.subr.mxu0 0.0
          %535 = vmatpush1.msra.mxu0 0.0
          %536 = vmatprep.subr.mxu0 0.0
          %537 = vmatpush1.msra.mxu0 0.0
          %538 = vmatprep.subr.mxu0 0.0
          %539 = vmatpush1.msra.mxu0 0.0
          %540 = vmatprep.subr.mxu0 0.0
          %541 = vmatpush1.msra.mxu0 0.0
          %542 = vmatprep.mubr.f32.mxu0 0.0
          %543 = vmatmul.mubr.f32.gmra.mrb[0].mxu0 %v476
          %v544 = vpop.f32.mrb[0].mxu0
          %v545 = vadd.f32 %v472, %v544
          %v546 = vpop.f32.mrb[0].mxu0
          %547 = vdwg.mxu0
          %vm548 = vcmask 523264
          %549 = vst.msk [vmem:[#allocation3] sm:$0xff] %vm548, %v545
        $region76: #{tpu_custom_call.1} parent=51 // pred_fallthru
          _
        %v550 = vld [vmem:[%s392] sm:$0xff]
        %v551 = vld [vmem:[#allocation10] sm:$0xff]
        %v552 = vld [vmem:[#allocation10 + $0x8] sm:$0xff]
        %v553 = vld [vmem:[#allocation10 + $0x10] sm:$0xff]
        %v554 = vld [vmem:[#allocation10 + $0x18] sm:$0xff]
        %v555 = vld [vmem:[%s3] sm:$0x1]
        %v557 = vlaneseq
        %v558 = vshrl.u32 %v557, 7
        %v559 = vsub.s32 0, %v558
        %v560 = vrot.slane %v555, %v559
        %vm562 = vcmask 261120
        %v564 = vsel %vm562, %v550, 0
        %566 = vmatprep.subr.mxu0 0.0
        %567 = vmatpush1.msra.mxu0 %v551
        %568 = vmatprep.subr.mxu0 0.0
        %569 = vmatpush1.msra.mxu0 %v552
        %570 = vmatprep.subr.mxu0 0.0
        %571 = vmatpush1.msra.mxu0 %v553
        %572 = vmatprep.subr.mxu0 0.0
        %573 = vmatpush1.msra.mxu0 %v554
        %574 = vmatprep.subr.mxu0 0.0
        %575 = vmatpush1.msra.mxu0 0.0
        %576 = vmatprep.subr.mxu0 0.0
        %577 = vmatpush1.msra.mxu0 0.0
        %578 = vmatprep.subr.mxu0 0.0
        %579 = vmatpush1.msra.mxu0 0.0
        %580 = vmatprep.subr.mxu0 0.0
        %581 = vmatpush1.msra.mxu0 0.0
        %582 = vmatprep.subr.mxu0 0.0
        %583 = vmatpush1.msra.mxu0 0.0
        %584 = vmatprep.subr.mxu0 0.0
        %585 = vmatpush1.msra.mxu0 0.0
        %586 = vmatprep.subr.mxu0 0.0
        %587 = vmatpush1.msra.mxu0 0.0
        %588 = vmatprep.subr.mxu0 0.0
        %589 = vmatpush1.msra.mxu0 0.0
        %590 = vmatprep.subr.mxu0 0.0
        %591 = vmatpush1.msra.mxu0 0.0
        %592 = vmatprep.subr.mxu0 0.0
        %593 = vmatpush1.msra.mxu0 0.0
        %594 = vmatprep.subr.mxu0 0.0
        %595 = vmatpush1.msra.mxu0 0.0
        %596 = vmatprep.subr.mxu0 0.0
        %597 = vmatpush1.msra.mxu0 0.0
        %598 = vmatprep.subr.mxu0 0.0
        %599 = vmatpush1.msra.mxu0 0.0
        %600 = vmatprep.subr.mxu0 0.0
        %601 = vmatpush1.msra.mxu0 0.0
        %602 = vmatprep.subr.mxu0 0.0
        %603 = vmatpush1.msra.mxu0 0.0
        %604 = vmatprep.subr.mxu0 0.0
        %605 = vmatpush1.msra.mxu0 0.0
        %606 = vmatprep.subr.mxu0 0.0
        %607 = vmatpush1.msra.mxu0 0.0
        %608 = vmatprep.subr.mxu0 0.0
        %609 = vmatpush1.msra.mxu0 0.0
        %610 = vmatprep.subr.mxu0 0.0
        %611 = vmatpush1.msra.mxu0 0.0
        %612 = vmatprep.subr.mxu0 0.0
        %613 = vmatpush1.msra.mxu0 0.0
        %614 = vmatprep.subr.mxu0 0.0
        %615 = vmatpush1.msra.mxu0 0.0
        %616 = vmatprep.subr.mxu0 0.0
        %617 = vmatpush1.msra.mxu0 0.0
        %618 = vmatprep.subr.mxu0 0.0
        %619 = vmatpush1.msra.mxu0 0.0
        %620 = vmatprep.subr.mxu0 0.0
        %621 = vmatpush1.msra.mxu0 0.0
        %622 = vmatprep.subr.mxu0 0.0
        %623 = vmatpush1.msra.mxu0 0.0
        %624 = vmatprep.subr.mxu0 0.0
        %625 = vmatpush1.msra.mxu0 0.0
        %626 = vmatprep.subr.mxu0 0.0
        %627 = vmatpush1.msra.mxu0 0.0
        %628 = vmatprep.subr.mxu0 0.0
        %629 = vmatpush1.msra.mxu0 0.0
        %630 = vmatprep.mubr.f32.mxu0 0.0
        %631 = vmatmul.mubr.f32.gmra.mrb[0].mxu0 %v564
        %v632 = vpop.f32.mrb[0].mxu0
        %v633 = vadd.f32 %v560, %v632
        %v634 = vpop.f32.mrb[0].mxu0
        %635 = vdwg.mxu0
        %636 = vst.msk [vmem:[#allocation2] sm:$0xff] %vm562, %v633
        %v637 = vld [vmem:[#allocation2] sm:$0xff]
        %v638 = vld [vmem:[#allocation3] sm:$0xff]
        %vm639 = vcmask 64512
        %v641 = vsel %vm639, %v637, 0
        %v644 = vsel %vm639, %v638, 0
        %646 = vmatprep.subr.mxu0 0.0
        %647 = vmatpush1.xpose.msra.mxu0 %v644
        %648 = vmatprep.subr.mxu0 0.0
        %649 = vmatpush1.xpose.msra.mxu0 0.0
        %650 = vmatprep.subr.mxu0 0.0
        %651 = vmatpush1.xpose.msra.mxu0 0.0
        %652 = vmatprep.subr.mxu0 0.0
        %653 = vmatpush1.xpose.msra.mxu0 0.0
        %654 = vmatprep.subr.mxu0 0.0
        %655 = vmatpush1.xpose.msra.mxu0 0.0
        %656 = vmatprep.subr.mxu0 0.0
        %657 = vmatpush1.xpose.msra.mxu0 0.0
        %658 = vmatprep.subr.mxu0 0.0
        %659 = vmatpush1.xpose.msra.mxu0 0.0
        %660 = vmatprep.subr.mxu0 0.0
        %661 = vmatpush1.xpose.msra.mxu0 0.0
        %662 = vmatprep.subr.mxu0 0.0
        %663 = vmatpush1.xpose.msra.mxu0 0.0
        %664 = vmatprep.subr.mxu0 0.0
        %665 = vmatpush1.xpose.msra.mxu0 0.0
        %666 = vmatprep.subr.mxu0 0.0
        %667 = vmatpush1.xpose.msra.mxu0 0.0
        %668 = vmatprep.subr.mxu0 0.0
        %669 = vmatpush1.xpose.msra.mxu0 0.0
        %670 = vmatprep.subr.mxu0 0.0
        %671 = vmatpush1.xpose.msra.mxu0 0.0
        %672 = vmatprep.subr.mxu0 0.0
        %673 = vmatpush1.xpose.msra.mxu0 0.0
        %674 = vmatprep.subr.mxu0 0.0
        %675 = vmatpush1.xpose.msra.mxu0 0.0
        %676 = vmatprep.subr.mxu0 0.0
        %677 = vmatpush1.xpose.msra.mxu0 0.0
        %678 = vmatprep.subr.mxu0 0.0
        %679 = vmatpush1.xpose.msra.mxu0 0.0
        %680 = vmatprep.subr.mxu0 0.0
        %681 = vmatpush1.xpose.msra.mxu0 0.0
        %682 = vmatprep.subr.mxu0 0.0
        %683 = vmatpush1.xpose.msra.mxu0 0.0
        %684 = vmatprep.subr.mxu0 0.0
        %685 = vmatpush1.xpose.msra.mxu0 0.0
        %686 = vmatprep.subr.mxu0 0.0
        %687 = vmatpush1.xpose.msra.mxu0 0.0
        %688 = vmatprep.subr.mxu0 0.0
        %689 = vmatpush1.xpose.msra.mxu0 0.0
        %690 = vmatprep.subr.mxu0 0.0
        %691 = vmatpush1.xpose.msra.mxu0 0.0
        %692 = vmatprep.subr.mxu0 0.0
        %693 = vmatpush1.xpose.msra.mxu0 0.0
        %694 = vmatprep.subr.mxu0 0.0
        %695 = vmatpush1.xpose.msra.mxu0 0.0
        %696 = vmatprep.subr.mxu0 0.0
        %697 = vmatpush1.xpose.msra.mxu0 0.0
        %698 = vmatprep.subr.mxu0 0.0
        %699 = vmatpush1.xpose.msra.mxu0 0.0
        %700 = vmatprep.subr.mxu0 0.0
        %701 = vmatpush1.xpose.msra.mxu0 0.0
        %702 = vmatprep.subr.mxu0 0.0
        %703 = vmatpush1.xpose.msra.mxu0 0.0
        %704 = vmatprep.subr.mxu0 0.0
        %705 = vmatpush1.xpose.msra.mxu0 0.0
        %706 = vmatprep.subr.mxu0 0.0
        %707 = vmatpush1.xpose.msra.mxu0 0.0
        %708 = vmatprep.subr.mxu0 0.0
        %709 = vmatpush1.xpose.msra.mxu0 0.0
        %710 = vmatprep.mubr.f32.mxu0 0.0
        %711 = vmatmul.mubr.f32.gmra.mrb[0].mxu0 %v641
        %v712 = vpop.f32.mrb[0].mxu0
        %v713 = vadd.f32 0.0, %v712
        %v714 = vpop.f32.mrb[0].mxu0
        %715 = vdwg.mxu0
        %v716 = vsel %vm639, %v713, -inf
        %717 = vmax.xlane.f32.xlu0 %v716
        %v718 = vpop.xlane.xlu0 %717
        %v719 = vsub.f32 %v713, %v718
        %v720 = vmul.f32 %v719, 1.442695
        %v721 = vpow.pop %v720
        %v722 = vsel %vm639, %v721, 0.0
        %723 = vadd.xlane.f32.xlu0 %v722
        %v724 = vpop.xlane.xlu0 %723
        %v725 = vrcp.pop %v724
        %v726 = vmul.f32 %v721, %v725
        %727 = vst.msk [vmem:[%s457] sm:$0xff] %vm639, %v726
        %728 = vrot.lane.b32.xlu0 %v638, 96
        %v729 = vpop.permute.xlu0 %728
        %v732 = vsel %vm639, %v726, 0
        %734 = vmatprep.subr.mxu0 0.0
        %735 = vmatpush1.msra.mxu0 %v729
        %736 = vmatprep.subr.mxu0 0.0
        %737 = vmatpush1.msra.mxu0 0.0
        %738 = vmatprep.subr.mxu0 0.0
        %739 = vmatpush1.msra.mxu0 0.0
        %740 = vmatprep.subr.mxu0 0.0
        %741 = vmatpush1.msra.mxu0 0.0
        %742 = vmatprep.subr.mxu0 0.0
        %743 = vmatpush1.msra.mxu0 0.0
        %744 = vmatprep.subr.mxu0 0.0
        %745 = vmatpush1.msra.mxu0 0.0
        %746 = vmatprep.subr.mxu0 0.0
        %747 = vmatpush1.msra.mxu0 0.0
        %748 = vmatprep.subr.mxu0 0.0
        %749 = vmatpush1.msra.mxu0 0.0
        %750 = vmatprep.subr.mxu0 0.0
        %751 = vmatpush1.msra.mxu0 0.0
        %752 = vmatprep.subr.mxu0 0.0
        %753 = vmatpush1.msra.mxu0 0.0
        %754 = vmatprep.subr.mxu0 0.0
        %755 = vmatpush1.msra.mxu0 0.0
        %756 = vmatprep.subr.mxu0 0.0
        %757 = vmatpush1.msra.mxu0 0.0
        %758 = vmatprep.subr.mxu0 0.0
        %759 = vmatpush1.msra.mxu0 0.0
        %760 = vmatprep.subr.mxu0 0.0
        %761 = vmatpush1.msra.mxu0 0.0
        %762 = vmatprep.subr.mxu0 0.0
        %763 = vmatpush1.msra.mxu0 0.0
        %764 = vmatprep.subr.mxu0 0.0
        %765 = vmatpush1.msra.mxu0 0.0
        %766 = vmatprep.subr.mxu0 0.0
        %767 = vmatpush1.msra.mxu0 0.0
        %768 = vmatprep.subr.mxu0 0.0
        %769 = vmatpush1.msra.mxu0 0.0
        %770 = vmatprep.subr.mxu0 0.0
        %771 = vmatpush1.msra.mxu0 0.0
        %772 = vmatprep.subr.mxu0 0.0
        %773 = vmatpush1.msra.mxu0 0.0
        %774 = vmatprep.subr.mxu0 0.0
        %775 = vmatpush1.msra.mxu0 0.0
        %776 = vmatprep.subr.mxu0 0.0
        %777 = vmatpush1.msra.mxu0 0.0
        %778 = vmatprep.subr.mxu0 0.0
        %779 = vmatpush1.msra.mxu0 0.0
        %780 = vmatprep.subr.mxu0 0.0
        %781 = vmatpush1.msra.mxu0 0.0
        %782 = vmatprep.subr.mxu0 0.0
        %783 = vmatpush1.msra.mxu0 0.0
        %784 = vmatprep.subr.mxu0 0.0
        %785 = vmatpush1.msra.mxu0 0.0
        %786 = vmatprep.subr.mxu0 0.0
        %787 = vmatpush1.msra.mxu0 0.0
        %788 = vmatprep.subr.mxu0 0.0
        %789 = vmatpush1.msra.mxu0 0.0
        %790 = vmatprep.subr.mxu0 0.0
        %791 = vmatpush1.msra.mxu0 0.0
        %792 = vmatprep.subr.mxu0 0.0
        %793 = vmatpush1.msra.mxu0 0.0
        %794 = vmatprep.subr.mxu0 0.0
        %795 = vmatpush1.msra.mxu0 0.0
        %796 = vmatprep.subr.mxu0 0.0
        %797 = vmatpush1.msra.mxu0 0.0
        %798 = vmatprep.mubr.f32.mxu0 0.0
        %799 = vmatmul.mubr.f32.gmra.mrb[0].mxu0 %v732
        %v800 = vpop.f32.mrb[0].mxu0
        %v801 = vadd.f32 0.0, %v800
        %v802 = vpop.f32.mrb[0].mxu0
        %803 = vdwg.mxu0
        %804 = vst.msk [vmem:[#allocation4] sm:$0xff] %vm639, %v801
        %v805 = vld [vmem:[#allocation2] sm:$0xff]
        %v806 = vld [vmem:[#allocation3] sm:$0xff]
        %808 = vrot.lane.b32.xlu0 %v805, 120
        %v809 = vpop.permute.xlu0 %808
        %811 = vrot.lane.b32.xlu0 %v806, 120
        %v812 = vpop.permute.xlu0 %811
        %v813 = vsel %vm639, %v809, 0
        %v815 = vsel %vm639, %v812, 0
        %817 = vmatprep.subr.mxu0 0.0
        %818 = vmatpush1.xpose.msra.mxu0 %v815
        %819 = vmatprep.subr.mxu0 0.0
        %820 = vmatpush1.xpose.msra.mxu0 0.0
        %821 = vmatprep.subr.mxu0 0.0
        %822 = vmatpush1.xpose.msra.mxu0 0.0
        %823 = vmatprep.subr.mxu0 0.0
        %824 = vmatpush1.xpose.msra.mxu0 0.0
        %825 = vmatprep.subr.mxu0 0.0
        %826 = vmatpush1.xpose.msra.mxu0 0.0
        %827 = vmatprep.subr.mxu0 0.0
        %828 = vmatpush1.xpose.msra.mxu0 0.0
        %829 = vmatprep.subr.mxu0 0.0
        %830 = vmatpush1.xpose.msra.mxu0 0.0
        %831 = vmatprep.subr.mxu0 0.0
        %832 = vmatpush1.xpose.msra.mxu0 0.0
        %833 = vmatprep.subr.mxu0 0.0
        %834 = vmatpush1.xpose.msra.mxu0 0.0
        %835 = vmatprep.subr.mxu0 0.0
        %836 = vmatpush1.xpose.msra.mxu0 0.0
        %837 = vmatprep.subr.mxu0 0.0
        %838 = vmatpush1.xpose.msra.mxu0 0.0
        %839 = vmatprep.subr.mxu0 0.0
        %840 = vmatpush1.xpose.msra.mxu0 0.0
        %841 = vmatprep.subr.mxu0 0.0
        %842 = vmatpush1.xpose.msra.mxu0 0.0
        %843 = vmatprep.subr.mxu0 0.0
        %844 = vmatpush1.xpose.msra.mxu0 0.0
        %845 = vmatprep.subr.mxu0 0.0
        %846 = vmatpush1.xpose.msra.mxu0 0.0
        %847 = vmatprep.subr.mxu0 0.0
        %848 = vmatpush1.xpose.msra.mxu0 0.0
        %849 = vmatprep.subr.mxu0 0.0
        %850 = vmatpush1.xpose.msra.mxu0 0.0
        %851 = vmatprep.subr.mxu0 0.0
        %852 = vmatpush1.xpose.msra.mxu0 0.0
        %853 = vmatprep.subr.mxu0 0.0
        %854 = vmatpush1.xpose.msra.mxu0 0.0
        %855 = vmatprep.subr.mxu0 0.0
        %856 = vmatpush1.xpose.msra.mxu0 0.0
        %857 = vmatprep.subr.mxu0 0.0
        %858 = vmatpush1.xpose.msra.mxu0 0.0
        %859 = vmatprep.subr.mxu0 0.0
        %860 = vmatpush1.xpose.msra.mxu0 0.0
        %861 = vmatprep.subr.mxu0 0.0
        %862 = vmatpush1.xpose.msra.mxu0 0.0
        %863 = vmatprep.subr.mxu0 0.0
        %864 = vmatpush1.xpose.msra.mxu0 0.0
        %865 = vmatprep.subr.mxu0 0.0
        %866 = vmatpush1.xpose.msra.mxu0 0.0
        %867 = vmatprep.subr.mxu0 0.0
        %868 = vmatpush1.xpose.msra.mxu0 0.0
        %869 = vmatprep.subr.mxu0 0.0
        %870 = vmatpush1.xpose.msra.mxu0 0.0
        %871 = vmatprep.subr.mxu0 0.0
        %872 = vmatpush1.xpose.msra.mxu0 0.0
        %873 = vmatprep.subr.mxu0 0.0
        %874 = vmatpush1.xpose.msra.mxu0 0.0
        %875 = vmatprep.subr.mxu0 0.0
        %876 = vmatpush1.xpose.msra.mxu0 0.0
        %877 = vmatprep.subr.mxu0 0.0
        %878 = vmatpush1.xpose.msra.mxu0 0.0
        %879 = vmatprep.subr.mxu0 0.0
        %880 = vmatpush1.xpose.msra.mxu0 0.0
        %881 = vmatprep.mubr.f32.mxu0 0.0
        %882 = vmatmul.mubr.f32.gmra.mrb[0].mxu0 %v813
        %v883 = vpop.f32.mrb[0].mxu0
        %v884 = vadd.f32 0.0, %v883
        %v885 = vpop.f32.mrb[0].mxu0
        %886 = vdwg.mxu0
        %v887 = vsel %vm639, %v884, -inf
        %888 = vmax.xlane.f32.xlu0 %v887
        %v889 = vpop.xlane.xlu0 %888
        %v890 = vsub.f32 %v884, %v889
        %v891 = vmul.f32 %v890, 1.442695
        %v892 = vpow.pop %v891
        %v893 = vsel %vm639, %v892, 0.0
        %894 = vadd.xlane.f32.xlu0 %v893
        %v895 = vpop.xlane.xlu0 %894
        %v896 = vrcp.pop %v895
        %v897 = vmul.f32 %v892, %v896
        %899 = vrot.lane.b32.xlu0 %v897, 8
        %v900 = vpop.permute.xlu0 %899
        %vm902 = vcmask 130112
        %903 = vst.msk [vmem:[%s457] sm:$0xff] %vm902, %v900
        %904 = vrot.lane.b32.xlu0 %v806, 88
        %v905 = vpop.permute.xlu0 %904
        %v907 = vsel %vm639, %v897, 0
        %909 = vmatprep.subr.mxu0 0.0
        %910 = vmatpush1.msra.mxu0 %v905
        %911 = vmatprep.subr.mxu0 0.0
        %912 = vmatpush1.msra.mxu0 0.0
        %913 = vmatprep.subr.mxu0 0.0
        %914 = vmatpush1.msra.mxu0 0.0
        %915 = vmatprep.subr.mxu0 0.0
        %916 = vmatpush1.msra.mxu0 0.0
        %917 = vmatprep.subr.mxu0 0.0
        %918 = vmatpush1.msra.mxu0 0.0
        %919 = vmatprep.subr.mxu0 0.0
        %920 = vmatpush1.msra.mxu0 0.0
        %921 = vmatprep.subr.mxu0 0.0
        %922 = vmatpush1.msra.mxu0 0.0
        %923 = vmatprep.subr.mxu0 0.0
        %924 = vmatpush1.msra.mxu0 0.0
        %925 = vmatprep.subr.mxu0 0.0
        %926 = vmatpush1.msra.mxu0 0.0
        %927 = vmatprep.subr.mxu0 0.0
        %928 = vmatpush1.msra.mxu0 0.0
        %929 = vmatprep.subr.mxu0 0.0
        %930 = vmatpush1.msra.mxu0 0.0
        %931 = vmatprep.subr.mxu0 0.0
        %932 = vmatpush1.msra.mxu0 0.0
        %933 = vmatprep.subr.mxu0 0.0
        %934 = vmatpush1.msra.mxu0 0.0
        %935 = vmatprep.subr.mxu0 0.0
        %936 = vmatpush1.msra.mxu0 0.0
        %937 = vmatprep.subr.mxu0 0.0
        %938 = vmatpush1.msra.mxu0 0.0
        %939 = vmatprep.subr.mxu0 0.0
        %940 = vmatpush1.msra.mxu0 0.0
        %941 = vmatprep.subr.mxu0 0.0
        %942 = vmatpush1.msra.mxu0 0.0
        %943 = vmatprep.subr.mxu0 0.0
        %944 = vmatpush1.msra.mxu0 0.0
        %945 = vmatprep.subr.mxu0 0.0
        %946 = vmatpush1.msra.mxu0 0.0
        %947 = vmatprep.subr.mxu0 0.0
        %948 = vmatpush1.msra.mxu0 0.0
        %949 = vmatprep.subr.mxu0 0.0
        %950 = vmatpush1.msra.mxu0 0.0
        %951 = vmatprep.subr.mxu0 0.0
        %952 = vmatpush1.msra.mxu0 0.0
        %953 = vmatprep.subr.mxu0 0.0
        %954 = vmatpush1.msra.mxu0 0.0
        %955 = vmatprep.subr.mxu0 0.0
        %956 = vmatpush1.msra.mxu0 0.0
        %957 = vmatprep.subr.mxu0 0.0
        %958 = vmatpush1.msra.mxu0 0.0
        %959 = vmatprep.subr.mxu0 0.0
        %960 = vmatpush1.msra.mxu0 0.0
        %961 = vmatprep.subr.mxu0 0.0
        %962 = vmatpush1.msra.mxu0 0.0
        %963 = vmatprep.subr.mxu0 0.0
        %964 = vmatpush1.msra.mxu0 0.0
        %965 = vmatprep.subr.mxu0 0.0
        %966 = vmatpush1.msra.mxu0 0.0
        %967 = vmatprep.subr.mxu0 0.0
        %968 = vmatpush1.msra.mxu0 0.0
        %969 = vmatprep.subr.mxu0 0.0
        %970 = vmatpush1.msra.mxu0 0.0
        %971 = vmatprep.subr.mxu0 0.0
        %972 = vmatpush1.msra.mxu0 0.0
        %973 = vmatprep.mubr.f32.mxu0 0.0
        %974 = vmatmul.mubr.f32.gmra.mrb[0].mxu0 %v907
        %v975 = vpop.f32.mrb[0].mxu0
        %v976 = vadd.f32 0.0, %v975
        %v977 = vpop.f32.mrb[0].mxu0
        %978 = vdwg.mxu0
        %980 = vrot.lane.b32.xlu0 %v976, 8
        %v981 = vpop.permute.xlu0 %980
        %983 = vst.msk [vmem:[#allocation4] sm:$0xff] %vm902, %v981
        %v984 = vld [vmem:[#allocation2] sm:$0xff]
        %v985 = vld [vmem:[#allocation3] sm:$0xff]
        %987 = vrot.lane.b32.xlu0 %v984, 112
        %v988 = vpop.permute.xlu0 %987
        %990 = vrot.lane.b32.xlu0 %v985, 112
        %v991 = vpop.permute.xlu0 %990
        %v992 = vsel %vm639, %v988, 0
        %v994 = vsel %vm639, %v991, 0
        %996 = vmatprep.subr.mxu0 0.0
        %997 = vmatpush1.xpose.msra.mxu0 %v994
        %998 = vmatprep.subr.mxu0 0.0
        %999 = vmatpush1.xpose.msra.mxu0 0.0
        %1000 = vmatprep.subr.mxu0 0.0
        %1001 = vmatpush1.xpose.msra.mxu0 0.0
        %1002 = vmatprep.subr.mxu0 0.0
        %1003 = vmatpush1.xpose.msra.mxu0 0.0
        %1004 = vmatprep.subr.mxu0 0.0
        %1005 = vmatpush1.xpose.msra.mxu0 0.0
        %1006 = vmatprep.subr.mxu0 0.0
        %1007 = vmatpush1.xpose.msra.mxu0 0.0
        %1008 = vmatprep.subr.mxu0 0.0
        %1009 = vmatpush1.xpose.msra.mxu0 0.0
        %1010 = vmatprep.subr.mxu0 0.0
        %1011 = vmatpush1.xpose.msra.mxu0 0.0
        %1012 = vmatprep.subr.mxu0 0.0
        %1013 = vmatpush1.xpose.msra.mxu0 0.0
        %1014 = vmatprep.subr.mxu0 0.0
        %1015 = vmatpush1.xpose.msra.mxu0 0.0
        %1016 = vmatprep.subr.mxu0 0.0
        %1017 = vmatpush1.xpose.msra.mxu0 0.0
        %1018 = vmatprep.subr.mxu0 0.0
        %1019 = vmatpush1.xpose.msra.mxu0 0.0
        %1020 = vmatprep.subr.mxu0 0.0
        %1021 = vmatpush1.xpose.msra.mxu0 0.0
        %1022 = vmatprep.subr.mxu0 0.0
        %1023 = vmatpush1.xpose.msra.mxu0 0.0
        %1024 = vmatprep.subr.mxu0 0.0
        %1025 = vmatpush1.xpose.msra.mxu0 0.0
        %1026 = vmatprep.subr.mxu0 0.0
        %1027 = vmatpush1.xpose.msra.mxu0 0.0
        %1028 = vmatprep.subr.mxu0 0.0
        %1029 = vmatpush1.xpose.msra.mxu0 0.0
        %1030 = vmatprep.subr.mxu0 0.0
        %1031 = vmatpush1.xpose.msra.mxu0 0.0
        %1032 = vmatprep.subr.mxu0 0.0
        %1033 = vmatpush1.xpose.msra.mxu0 0.0
        %1034 = vmatprep.subr.mxu0 0.0
        %1035 = vmatpush1.xpose.msra.mxu0 0.0
        %1036 = vmatprep.subr.mxu0 0.0
        %1037 = vmatpush1.xpose.msra.mxu0 0.0
        %1038 = vmatprep.subr.mxu0 0.0
        %1039 = vmatpush1.xpose.msra.mxu0 0.0
        %1040 = vmatprep.subr.mxu0 0.0
        %1041 = vmatpush1.xpose.msra.mxu0 0.0
        %1042 = vmatprep.subr.mxu0 0.0
        %1043 = vmatpush1.xpose.msra.mxu0 0.0
        %1044 = vmatprep.subr.mxu0 0.0
        %1045 = vmatpush1.xpose.msra.mxu0 0.0
        %1046 = vmatprep.subr.mxu0 0.0
        %1047 = vmatpush1.xpose.msra.mxu0 0.0
        %1048 = vmatprep.subr.mxu0 0.0
        %1049 = vmatpush1.xpose.msra.mxu0 0.0
        %1050 = vmatprep.subr.mxu0 0.0
        %1051 = vmatpush1.xpose.msra.mxu0 0.0
        %1052 = vmatprep.subr.mxu0 0.0
        %1053 = vmatpush1.xpose.msra.mxu0 0.0
        %1054 = vmatprep.subr.mxu0 0.0
        %1055 = vmatpush1.xpose.msra.mxu0 0.0
        %1056 = vmatprep.subr.mxu0 0.0
        %1057 = vmatpush1.xpose.msra.mxu0 0.0
        %1058 = vmatprep.subr.mxu0 0.0
        %1059 = vmatpush1.xpose.msra.mxu0 0.0
        %1060 = vmatprep.mubr.f32.mxu0 0.0
        %1061 = vmatmul.mubr.f32.gmra.mrb[0].mxu0 %v992
        %v1062 = vpop.f32.mrb[0].mxu0
        %v1063 = vadd.f32 0.0, %v1062
        %v1064 = vpop.f32.mrb[0].mxu0
        %1065 = vdwg.mxu0
        %v1066 = vsel %vm639, %v1063, -inf
        %1067 = vmax.xlane.f32.xlu0 %v1066
        %v1068 = vpop.xlane.xlu0 %1067
        %v1069 = vsub.f32 %v1063, %v1068
        %v1070 = vmul.f32 %v1069, 1.442695
        %v1071 = vpow.pop %v1070
        %v1072 = vsel %vm639, %v1071, 0.0
        %1073 = vadd.xlane.f32.xlu0 %v1072
        %v1074 = vpop.xlane.xlu0 %1073
        %v1075 = vrcp.pop %v1074
        %v1076 = vmul.f32 %v1071, %v1075
        %1078 = vrot.lane.b32.xlu0 %v1076, 16
        %v1079 = vpop.permute.xlu0 %1078
        %vm1081 = vcmask 195712
        %1082 = vst.msk [vmem:[%s457] sm:$0xff] %vm1081, %v1079
        %1083 = vrot.lane.b32.xlu0 %v985, 80
        %v1084 = vpop.permute.xlu0 %1083
        %v1086 = vsel %vm639, %v1076, 0
        %1088 = vmatprep.subr.mxu0 0.0
        %1089 = vmatpush1.msra.mxu0 %v1084
        %1090 = vmatprep.subr.mxu0 0.0
        %1091 = vmatpush1.msra.mxu0 0.0
        %1092 = vmatprep.subr.mxu0 0.0
        %1093 = vmatpush1.msra.mxu0 0.0
        %1094 = vmatprep.subr.mxu0 0.0
        %1095 = vmatpush1.msra.mxu0 0.0
        %1096 = vmatprep.subr.mxu0 0.0
        %1097 = vmatpush1.msra.mxu0 0.0
        %1098 = vmatprep.subr.mxu0 0.0
        %1099 = vmatpush1.msra.mxu0 0.0
        %1100 = vmatprep.subr.mxu0 0.0
        %1101 = vmatpush1.msra.mxu0 0.0
        %1102 = vmatprep.subr.mxu0 0.0
        %1103 = vmatpush1.msra.mxu0 0.0
        %1104 = vmatprep.subr.mxu0 0.0
        %1105 = vmatpush1.msra.mxu0 0.0
        %1106 = vmatprep.subr.mxu0 0.0
        %1107 = vmatpush1.msra.mxu0 0.0
        %1108 = vmatprep.subr.mxu0 0.0
        %1109 = vmatpush1.msra.mxu0 0.0
        %1110 = vmatprep.subr.mxu0 0.0
        %1111 = vmatpush1.msra.mxu0 0.0
        %1112 = vmatprep.subr.mxu0 0.0
        %1113 = vmatpush1.msra.mxu0 0.0
        %1114 = vmatprep.subr.mxu0 0.0
        %1115 = vmatpush1.msra.mxu0 0.0
        %1116 = vmatprep.subr.mxu0 0.0
        %1117 = vmatpush1.msra.mxu0 0.0
        %1118 = vmatprep.subr.mxu0 0.0
        %1119 = vmatpush1.msra.mxu0 0.0
        %1120 = vmatprep.subr.mxu0 0.0
        %1121 = vmatpush1.msra.mxu0 0.0
        %1122 = vmatprep.subr.mxu0 0.0
        %1123 = vmatpush1.msra.mxu0 0.0
        %1124 = vmatprep.subr.mxu0 0.0
        %1125 = vmatpush1.msra.mxu0 0.0
        %1126 = vmatprep.subr.mxu0 0.0
        %1127 = vmatpush1.msra.mxu0 0.0
        %1128 = vmatprep.subr.mxu0 0.0
        %1129 = vmatpush1.msra.mxu0 0.0
        %1130 = vmatprep.subr.mxu0 0.0
        %1131 = vmatpush1.msra.mxu0 0.0
        %1132 = vmatprep.subr.mxu0 0.0
        %1133 = vmatpush1.msra.mxu0 0.0
        %1134 = vmatprep.subr.mxu0 0.0
        %1135 = vmatpush1.msra.mxu0 0.0
        %1136 = vmatprep.subr.mxu0 0.0
        %1137 = vmatpush1.msra.mxu0 0.0
        %1138 = vmatprep.subr.mxu0 0.0
        %1139 = vmatpush1.msra.mxu0 0.0
        %1140 = vmatprep.subr.mxu0 0.0
        %1141 = vmatpush1.msra.mxu0 0.0
        %1142 = vmatprep.subr.mxu0 0.0
        %1143 = vmatpush1.msra.mxu0 0.0
        %1144 = vmatprep.subr.mxu0 0.0
        %1145 = vmatpush1.msra.mxu0 0.0
        %1146 = vmatprep.subr.mxu0 0.0
        %1147 = vmatpush1.msra.mxu0 0.0
        %1148 = vmatprep.subr.mxu0 0.0
        %1149 = vmatpush1.msra.mxu0 0.0
        %1150 = vmatprep.subr.mxu0 0.0
        %1151 = vmatpush1.msra.mxu0 0.0
        %1152 = vmatprep.mubr.f32.mxu0 0.0
        %1153 = vmatmul.mubr.f32.gmra.mrb[0].mxu0 %v1086
        %v1154 = vpop.f32.mrb[0].mxu0
        %v1155 = vadd.f32 0.0, %v1154
        %v1156 = vpop.f32.mrb[0].mxu0
        %1157 = vdwg.mxu0
        %1159 = vrot.lane.b32.xlu0 %v1155, 16
        %v1160 = vpop.permute.xlu0 %1159
        %1162 = vst.msk [vmem:[#allocation4] sm:$0xff] %vm1081, %v1160
        %v1163 = vld [vmem:[#allocation2] sm:$0xff]
        %v1164 = vld [vmem:[#allocation3] sm:$0xff]
        %1166 = vrot.lane.b32.xlu0 %v1163, 104
        %v1167 = vpop.permute.xlu0 %1166
        %1169 = vrot.lane.b32.xlu0 %v1164, 104
        %v1170 = vpop.permute.xlu0 %1169
        %v1171 = vsel %vm639, %v1167, 0
        %v1173 = vsel %vm639, %v1170, 0
        %1175 = vmatprep.subr.mxu0 0.0
        %1176 = vmatpush1.xpose.msra.mxu0 %v1173
        %1177 = vmatprep.subr.mxu0 0.0
        %1178 = vmatpush1.xpose.msra.mxu0 0.0
        %1179 = vmatprep.subr.mxu0 0.0
        %1180 = vmatpush1.xpose.msra.mxu0 0.0
        %1181 = vmatprep.subr.mxu0 0.0
        %1182 = vmatpush1.xpose.msra.mxu0 0.0
        %1183 = vmatprep.subr.mxu0 0.0
        %1184 = vmatpush1.xpose.msra.mxu0 0.0
        %1185 = vmatprep.subr.mxu0 0.0
        %1186 = vmatpush1.xpose.msra.mxu0 0.0
        %1187 = vmatprep.subr.mxu0 0.0
        %1188 = vmatpush1.xpose.msra.mxu0 0.0
        %1189 = vmatprep.subr.mxu0 0.0
        %1190 = vmatpush1.xpose.msra.mxu0 0.0
        %1191 = vmatprep.subr.mxu0 0.0
        %1192 = vmatpush1.xpose.msra.mxu0 0.0
        %1193 = vmatprep.subr.mxu0 0.0
        %1194 = vmatpush1.xpose.msra.mxu0 0.0
        %1195 = vmatprep.subr.mxu0 0.0
        %1196 = vmatpush1.xpose.msra.mxu0 0.0
        %1197 = vmatprep.subr.mxu0 0.0
        %1198 = vmatpush1.xpose.msra.mxu0 0.0
        %1199 = vmatprep.subr.mxu0 0.0
        %1200 = vmatpush1.xpose.msra.mxu0 0.0
        %1201 = vmatprep.subr.mxu0 0.0
        %1202 = vmatpush1.xpose.msra.mxu0 0.0
        %1203 = vmatprep.subr.mxu0 0.0
        %1204 = vmatpush1.xpose.msra.mxu0 0.0
        %1205 = vmatprep.subr.mxu0 0.0
        %1206 = vmatpush1.xpose.msra.mxu0 0.0
        %1207 = vmatprep.subr.mxu0 0.0
        %1208 = vmatpush1.xpose.msra.mxu0 0.0
        %1209 = vmatprep.subr.mxu0 0.0
        %1210 = vmatpush1.xpose.msra.mxu0 0.0
        %1211 = vmatprep.subr.mxu0 0.0
        %1212 = vmatpush1.xpose.msra.mxu0 0.0
        %1213 = vmatprep.subr.mxu0 0.0
        %1214 = vmatpush1.xpose.msra.mxu0 0.0
        %1215 = vmatprep.subr.mxu0 0.0
        %1216 = vmatpush1.xpose.msra.mxu0 0.0
        %1217 = vmatprep.subr.mxu0 0.0
        %1218 = vmatpush1.xpose.msra.mxu0 0.0
        %1219 = vmatprep.subr.mxu0 0.0
        %1220 = vmatpush1.xpose.msra.mxu0 0.0
        %1221 = vmatprep.subr.mxu0 0.0
        %1222 = vmatpush1.xpose.msra.mxu0 0.0
        %1223 = vmatprep.subr.mxu0 0.0
        %1224 = vmatpush1.xpose.msra.mxu0 0.0
        %1225 = vmatprep.subr.mxu0 0.0
        %1226 = vmatpush1.xpose.msra.mxu0 0.0
        %1227 = vmatprep.subr.mxu0 0.0
        %1228 = vmatpush1.xpose.msra.mxu0 0.0
        %1229 = vmatprep.subr.mxu0 0.0
        %1230 = vmatpush1.xpose.msra.mxu0 0.0
        %1231 = vmatprep.subr.mxu0 0.0
        %1232 = vmatpush1.xpose.msra.mxu0 0.0
        %1233 = vmatprep.subr.mxu0 0.0
        %1234 = vmatpush1.xpose.msra.mxu0 0.0
        %1235 = vmatprep.subr.mxu0 0.0
        %1236 = vmatpush1.xpose.msra.mxu0 0.0
        %1237 = vmatprep.subr.mxu0 0.0
        %1238 = vmatpush1.xpose.msra.mxu0 0.0
        %1239 = vmatprep.mubr.f32.mxu0 0.0
        %1240 = vmatmul.mubr.f32.gmra.mrb[0].mxu0 %v1171
        %v1241 = vpop.f32.mrb[0].mxu0
        %v1242 = vadd.f32 0.0, %v1241
        %v1243 = vpop.f32.mrb[0].mxu0
        %1244 = vdwg.mxu0
        %v1245 = vsel %vm639, %v1242, -inf
        %1246 = vmax.xlane.f32.xlu0 %v1245
        %v1247 = vpop.xlane.xlu0 %1246
        %v1248 = vsub.f32 %v1242, %v1247
        %v1249 = vmul.f32 %v1248, 1.442695
        %v1250 = vpow.pop %v1249
        %v1251 = vsel %vm639, %v1250, 0.0
        %1252 = vadd.xlane.f32.xlu0 %v1251
        %v1253 = vpop.xlane.xlu0 %1252
        %v1254 = vrcp.pop %v1253
        %v1255 = vmul.f32 %v1250, %v1254
        %1257 = vrot.lane.b32.xlu0 %v1255, 24
        %v1258 = vpop.permute.xlu0 %1257
        %vm1260 = vcmask 261312
        %1261 = vst.msk [vmem:[%s457] sm:$0xff] %vm1260, %v1258
        %1262 = vrot.lane.b32.xlu0 %v1164, 72
        %v1263 = vpop.permute.xlu0 %1262
        %v1265 = vsel %vm639, %v1255, 0
        %1267 = vmatprep.subr.mxu0 0.0
        %1268 = vmatpush1.msra.mxu0 %v1263
        %1269 = vmatprep.subr.mxu0 0.0
        %1270 = vmatpush1.msra.mxu0 0.0
        %1271 = vmatprep.subr.mxu0 0.0
        %1272 = vmatpush1.msra.mxu0 0.0
        %1273 = vmatprep.subr.mxu0 0.0
        %1274 = vmatpush1.msra.mxu0 0.0
        %1275 = vmatprep.subr.mxu0 0.0
        %1276 = vmatpush1.msra.mxu0 0.0
        %1277 = vmatprep.subr.mxu0 0.0
        %1278 = vmatpush1.msra.mxu0 0.0
        %1279 = vmatprep.subr.mxu0 0.0
        %1280 = vmatpush1.msra.mxu0 0.0
        %1281 = vmatprep.subr.mxu0 0.0
        %1282 = vmatpush1.msra.mxu0 0.0
        %1283 = vmatprep.subr.mxu0 0.0
        %1284 = vmatpush1.msra.mxu0 0.0
        %1285 = vmatprep.subr.mxu0 0.0
        %1286 = vmatpush1.msra.mxu0 0.0
        %1287 = vmatprep.subr.mxu0 0.0
        %1288 = vmatpush1.msra.mxu0 0.0
        %1289 = vmatprep.subr.mxu0 0.0
        %1290 = vmatpush1.msra.mxu0 0.0
        %1291 = vmatprep.subr.mxu0 0.0
        %1292 = vmatpush1.msra.mxu0 0.0
        %1293 = vmatprep.subr.mxu0 0.0
        %1294 = vmatpush1.msra.mxu0 0.0
        %1295 = vmatprep.subr.mxu0 0.0
        %1296 = vmatpush1.msra.mxu0 0.0
        %1297 = vmatprep.subr.mxu0 0.0
        %1298 = vmatpush1.msra.mxu0 0.0
        %1299 = vmatprep.subr.mxu0 0.0
        %1300 = vmatpush1.msra.mxu0 0.0
        %1301 = vmatprep.subr.mxu0 0.0
        %1302 = vmatpush1.msra.mxu0 0.0
        %1303 = vmatprep.subr.mxu0 0.0
        %1304 = vmatpush1.msra.mxu0 0.0
        %1305 = vmatprep.subr.mxu0 0.0
        %1306 = vmatpush1.msra.mxu0 0.0
        %1307 = vmatprep.subr.mxu0 0.0
        %1308 = vmatpush1.msra.mxu0 0.0
        %1309 = vmatprep.subr.mxu0 0.0
        %1310 = vmatpush1.msra.mxu0 0.0
        %1311 = vmatprep.subr.mxu0 0.0
        %1312 = vmatpush1.msra.mxu0 0.0
        %1313 = vmatprep.subr.mxu0 0.0
        %1314 = vmatpush1.msra.mxu0 0.0
        %1315 = vmatprep.subr.mxu0 0.0
        %1316 = vmatpush1.msra.mxu0 0.0
        %1317 = vmatprep.subr.mxu0 0.0
        %1318 = vmatpush1.msra.mxu0 0.0
        %1319 = vmatprep.subr.mxu0 0.0
        %1320 = vmatpush1.msra.mxu0 0.0
        %1321 = vmatprep.subr.mxu0 0.0
        %1322 = vmatpush1.msra.mxu0 0.0
        %1323 = vmatprep.subr.mxu0 0.0
        %1324 = vmatpush1.msra.mxu0 0.0
        %1325 = vmatprep.subr.mxu0 0.0
        %1326 = vmatpush1.msra.mxu0 0.0
        %1327 = vmatprep.subr.mxu0 0.0
        %1328 = vmatpush1.msra.mxu0 0.0
        %1329 = vmatprep.subr.mxu0 0.0
        %1330 = vmatpush1.msra.mxu0 0.0
        %1331 = vmatprep.mubr.f32.mxu0 0.0
        %1332 = vmatmul.mubr.f32.gmra.mrb[0].mxu0 %v1265
        %v1333 = vpop.f32.mrb[0].mxu0
        %v1334 = vadd.f32 0.0, %v1333
        %v1335 = vpop.f32.mrb[0].mxu0
        %1336 = vdwg.mxu0
        %1338 = vrot.lane.b32.xlu0 %v1334, 24
        %v1339 = vpop.permute.xlu0 %1338
        %1341 = vst.msk [vmem:[#allocation4] sm:$0xff] %vm1260, %v1339
        %v1342 = vld [vmem:[#allocation4] sm:$0xff]
        %v1343 = vld [vmem:[#allocation13] sm:$0xff]
        %v1344 = vld [vmem:[#allocation13 + $0x8] sm:$0xff]
        %v1345 = vld [vmem:[#allocation13 + $0x10] sm:$0xff]
        %v1346 = vld [vmem:[#allocation13 + $0x18] sm:$0xff]
        %v1347 = vld [vmem:[%s7] sm:$0x1]
        %v1349 = vlaneseq
        %v1350 = vshrl.u32 %v1349, 7
        %v1351 = vsub.s32 0, %v1350
        %v1352 = vrot.slane %v1347, %v1351
        %v1355 = vsel %vm562, %v1342, 0
        %1357 = vmatprep.subr.mxu0 0.0
        %1358 = vmatpush1.msra.mxu0 %v1343
        %1359 = vmatprep.subr.mxu0 0.0
        %1360 = vmatpush1.msra.mxu0 %v1344
        %1361 = vmatprep.subr.mxu0 0.0
        %1362 = vmatpush1.msra.mxu0 %v1345
        %1363 = vmatprep.subr.mxu0 0.0
        %1364 = vmatpush1.msra.mxu0 %v1346
        %1365 = vmatprep.subr.mxu0 0.0
        %1366 = vmatpush1.msra.mxu0 0.0
        %1367 = vmatprep.subr.mxu0 0.0
        %1368 = vmatpush1.msra.mxu0 0.0
        %1369 = vmatprep.subr.mxu0 0.0
        %1370 = vmatpush1.msra.mxu0 0.0
        %1371 = vmatprep.subr.mxu0 0.0
        %1372 = vmatpush1.msra.mxu0 0.0
        %1373 = vmatprep.subr.mxu0 0.0
        %1374 = vmatpush1.msra.mxu0 0.0
        %1375 = vmatprep.subr.mxu0 0.0
        %1376 = vmatpush1.msra.mxu0 0.0
        %1377 = vmatprep.subr.mxu0 0.0
        %1378 = vmatpush1.msra.mxu0 0.0
        %1379 = vmatprep.subr.mxu0 0.0
        %1380 = vmatpush1.msra.mxu0 0.0
        %1381 = vmatprep.subr.mxu0 0.0
        %1382 = vmatpush1.msra.mxu0 0.0
        %1383 = vmatprep.subr.mxu0 0.0
        %1384 = vmatpush1.msra.mxu0 0.0
        %1385 = vmatprep.subr.mxu0 0.0
        %1386 = vmatpush1.msra.mxu0 0.0
        %1387 = vmatprep.subr.mxu0 0.0
        %1388 = vmatpush1.msra.mxu0 0.0
        %1389 = vmatprep.subr.mxu0 0.0
        %1390 = vmatpush1.msra.mxu0 0.0
        %1391 = vmatprep.subr.mxu0 0.0
        %1392 = vmatpush1.msra.mxu0 0.0
        %1393 = vmatprep.subr.mxu0 0.0
        %1394 = vmatpush1.msra.mxu0 0.0
        %1395 = vmatprep.subr.mxu0 0.0
        %1396 = vmatpush1.msra.mxu0 0.0
        %1397 = vmatprep.subr.mxu0 0.0
        %1398 = vmatpush1.msra.mxu0 0.0
        %1399 = vmatprep.subr.mxu0 0.0
        %1400 = vmatpush1.msra.mxu0 0.0
        %1401 = vmatprep.subr.mxu0 0.0
        %1402 = vmatpush1.msra.mxu0 0.0
        %1403 = vmatprep.subr.mxu0 0.0
        %1404 = vmatpush1.msra.mxu0 0.0
        %1405 = vmatprep.subr.mxu0 0.0
        %1406 = vmatpush1.msra.mxu0 0.0
        %1407 = vmatprep.subr.mxu0 0.0
        %1408 = vmatpush1.msra.mxu0 0.0
        %1409 = vmatprep.subr.mxu0 0.0
        %1410 = vmatpush1.msra.mxu0 0.0
        %1411 = vmatprep.subr.mxu0 0.0
        %1412 = vmatpush1.msra.mxu0 0.0
        %1413 = vmatprep.subr.mxu0 0.0
        %1414 = vmatpush1.msra.mxu0 0.0
        %1415 = vmatprep.subr.mxu0 0.0
        %1416 = vmatpush1.msra.mxu0 0.0
        %1417 = vmatprep.subr.mxu0 0.0
        %1418 = vmatpush1.msra.mxu0 0.0
        %1419 = vmatprep.subr.mxu0 0.0
        %1420 = vmatpush1.msra.mxu0 0.0
        %1421 = vmatprep.mubr.f32.mxu0 0.0
        %1422 = vmatmul.mubr.f32.gmra.mrb[0].mxu0 %v1355
        %v1423 = vpop.f32.mrb[0].mxu0
        %v1424 = vadd.f32 %v1352, %v1423
        %v1425 = vpop.f32.mrb[0].mxu0
        %1426 = vdwg.mxu0
        %1427 = vst.msk [vmem:[%s450] sm:$0xff] %vm562, %v1424
        %s1428 = sand.u32 %s236, 1
        %s1429 = scalar_lea.sflag [#allocation7], %s1428
        %s1430 = sand.u32 %s236, 1
        %s1431 = smul.addr %s1430, 8
        %s1432 = scalar_lea.vmem [#allocation14], %s1431
        %s1433 = sand.u32 %s264, 1
        %s1434 = scalar_lea.sflag [#allocation16], %s1433
        %s1435 = sand.u32 %s264, 1
        %s1436 = smul.addr %s1435, 8
        %s1437 = scalar_lea.vmem [#allocation15], %s1436
        // Predicated region
        $region77: #{tpu_custom_call.1} parent=51 // pred_check
          %p1438 = pneg %p246
        $region78: #{tpu_custom_call.1} parent=51 // pred_check_branch
          %1440 = sbr.rel (%p1438) target = $region80
        $region79: #{tpu_custom_call.1} parent=51 // pred_region
          %s1442 = ssub.s32 128, 128
          %1443 = vsyncadd %s1429, %s1442
          %s1444 = sadd.s32 %s39, %s38
          %s1445 = smul.addr %s1444, 128
          %s1446 = scalar_lea.hbm %s8, %s1445
          %s1448 = sshll.u32 %s1432, 4
          %s1449 = int_to_ptr.vmem [resolvable:$true] %s1448
          %1451 = dma.vmem_to_hbm [thread:$0]  %s1449, 128, %s1446, %s1429
        $region80: #{tpu_custom_call.1} parent=51 // pred_fallthru
          _
        // Predicated region
        $region81: #{tpu_custom_call.1} parent=51 // pred_check
          %p1452 = pneg %p274
        $region82: #{tpu_custom_call.1} parent=51 // pred_check_branch
          %1454 = sbr.rel (%p1452) target = $region84
        $region83: #{tpu_custom_call.1} parent=51 // pred_region
          %s1456 = ssub.s32 128, 128
          %1457 = vsyncadd %s1434, %s1456
          %s1458 = sadd.s32 %s39, %s38
          %s1459 = smul.addr %s1458, 128
          %s1460 = scalar_lea.hbm %s9, %s1459
          %s1462 = sshll.u32 %s1437, 4
          %s1463 = int_to_ptr.vmem [resolvable:$true] %s1462
          %1465 = dma.vmem_to_hbm [thread:$0]  %s1463, 128, %s1460, %s1434
        $region84: #{tpu_custom_call.1} parent=51 // pred_fallthru
          _
      $region52: #{tpu_custom_call.1} parent=5 // pred_fallthru
        _
      %p1466 = scmp.le.s32.totalorder 2, %s29
      // Predicated region
      $region85: #{tpu_custom_call.1} parent=5 // pred_check
        %p1467 = pneg %p1466
      $region86: #{tpu_custom_call.1} parent=5 // pred_check_branch
        %1469 = sbr.rel (%p1467) target = $region88
      $region87: #{tpu_custom_call.1} parent=5 // pred_region
        %s1470 = ssub.s32 %s29, 2
        // Predicated region
        $region89: #{tpu_custom_call.1} parent=87 // pred_check
          %p1471 = pneg %p252
        $region90: #{tpu_custom_call.1} parent=87 // pred_check_branch
          %1473 = sbr.rel (%p1471) target = $region92
        $region91: #{tpu_custom_call.1} parent=87 // pred_region
          %s1474 = sand.u32 %s237, 1
          %s1475 = scalar_lea.sflag [#allocation7], %s1474
          %s1476 = sand.u32 %s237, 1
          %s1477 = smul.addr %s1476, 8
          %s1478 = scalar_lea.vmem [#allocation14], %s1477
          %1479 = dma.done %s1475, 128
        $region92: #{tpu_custom_call.1} parent=87 // pred_fallthru
          _
        // Predicated region
        $region93: #{tpu_custom_call.1} parent=87 // pred_check
          %p1480 = pneg %p280
        $region94: #{tpu_custom_call.1} parent=87 // pred_check_branch
          %1482 = sbr.rel (%p1480) target = $region96
        $region95: #{tpu_custom_call.1} parent=87 // pred_region
          %s1483 = sand.u32 %s265, 1
          %s1484 = scalar_lea.sflag [#allocation16], %s1483
          %s1485 = sand.u32 %s265, 1
          %s1486 = smul.addr %s1485, 8
          %s1487 = scalar_lea.vmem [#allocation15], %s1486
          %1488 = dma.done %s1484, 128
        $region96: #{tpu_custom_call.1} parent=87 // pred_fallthru
          _
      $region88: #{tpu_custom_call.1} parent=5 // pred_fallthru
        _
    $region6: #{tpu_custom_call.1} parent=1 // loop_footer
      %s33 = sadd.s32 1, %s29
    $region7: #{tpu_custom_call.1} parent=1 // loop_footer_branch
      %28 = sbr.rel target = $region3
    $region8: #{tpu_custom_call.1} parent=1 // loop_exit
      _
    %1489 = vsyncpa [#allocation6], 1
    %s1490 = scalar_lea.sflag [#allocation6], 1
    %1491 = vsyncpa %s1490, 1
    %1492 = vsyncpa [#allocation9], 1
    %s1493 = scalar_lea.sflag [#allocation9], 1
    %1494 = vsyncpa %s1493, 1
    %1495 = vsyncpa [#allocation12], 1
    %1496 = vsyncpa [#allocation7], 1
    %s1497 = scalar_lea.sflag [#allocation7], 1
    %1498 = vsyncpa %s1497, 1
    %1499 = vsyncpa [#allocation16], 1
    %s1500 = scalar_lea.sflag [#allocation16], 1
    %1501 = vsyncpa %s1500, 1

</llo_original>
